<compile_context>
chip_gen: v7x
topology: tpu7x:2x2x1
jax: 0.10.0
libtpu: 0.0.40
codegen_flags: <defaults>
</compile_context>

<pallas_src>
import jax
import jax.numpy as jnp
from jax.experimental import pallas as pl
from jax.experimental.pallas import tpu as pltpu

# ----------------------------- model config ---------------------------------
INPUT_DIM = 16
NUM_CLASSES = 1
NUM_BLOCKS = 2            # num_transformer_blocks (small config for the demo)
ATTN_DIM = 128            # attention_dim
FF_HIDDEN = 256           # ff_hidden_dim
HALF_FF = FF_HIDDEN // 2
LN_EPS = 1e-5
BN_EPS = 1e-5

BATCH = 16
W_COLS = 256              # lane width of the packed bf16 weight slab
V_COLS = 256              # lane width of the packed f32 vector slab
OUT_PAD = 128             # lane-dense logits width (sliced to NUM_CLASSES outside)

assert NUM_CLASSES == 1   # final projection is done as a VPU lane-reduction


# --------------------------- packed-slab layouts ------------------------------
def _w_layout():
    """Row offsets into the [W_ROWS, W_COLS] bf16 weight slab.

    Every matmul weight is stored [in, out] (the kernel computes h @ W + b,
    equivalent to PyTorch's x @ W.T), out-dim zero-padded to W_COLS lanes.
    All row offsets are multiples of 16 (bf16 sublane tile)."""
    off, r = {}, 0

    def add(name, k):
        nonlocal r
        off[name] = r
        r += k

    add("emb", INPUT_DIM)
    for b in range(NUM_BLOCKS):
        add(f"v{b}", ATTN_DIM)       # SelfAttention.v_linear
        add(f"o{b}", ATTN_DIM)       # SelfAttention.out_proj
        add(f"f1_{b}", ATTN_DIM)     # FeedForward.linear1
        add(f"f2_{b}", FF_HIDDEN)    # FeedForward.linear2
    add("h1", ATTN_DIM)              # head Linear(128 -> 256)
    add("h2", FF_HIDDEN)             # head Linear(256 -> 128)
    return off, r


def _v_layout():
    """Row offsets into the [V_ROWS_PAD, V_COLS] f32 vector slab.
    One row per bias / LayerNorm gamma / LayerNorm beta / folded-BN vector,
    plus the transposed final 128->1 weight and its bias."""
    off, r = {}, 0

    def add(name):
        nonlocal r
        off[name] = r
        r += 1

    add("bn_scale"); add("bn_shift")
    add("b_emb"); add("ln_emb_g"); add("ln_emb_b")
    for b in range(NUM_BLOCKS):
        add(f"ln_a_g{b}"); add(f"ln_a_b{b}")
        add(f"b_v{b}"); add(f"b_o{b}")
        add(f"ln_f_g{b}"); add(f"ln_f_b{b}")
        add(f"b_f1_{b}"); add(f"b_f2_{b}")
    add("b_h1"); add("ln_h1_g"); add("ln_h1_b")
    add("b_h2"); add("ln_h2_g"); add("ln_h2_b")
    add("w_out_t"); add("b_out")
    return off, r


W_OFF, W_ROWS = _w_layout()
V_OFF, V_ROWS = _v_layout()
V_ROWS_PAD = ((V_ROWS + 7) // 8) * 8


# ----------------------------- shared forward math ---------------------------
def _forward(x, vec, mat):
    """Shared math for the kernel body and the pure-JAX reference.

    vec(name, n) -> (1, n)  f32 vector parameter (bias / LN / BN / final row)
    mat(name, k, n) -> (k, n) bf16 matmul weight

    Inside the kernel these callables slice the slab Refs, so every weight is
    loaded at its point of use (short live ranges)."""

    def dense(h, wname, bname, k, n):
        w = mat(wname, k, n)
        return (jnp.dot(h.astype(jnp.bfloat16), w,
                        preferred_element_type=jnp.float32) + vec(bname, n))

    def layernorm(h, gname, bname, n):
        mu = jnp.mean(h, axis=-1, keepdims=True)
        var = jnp.mean((h - mu) ** 2, axis=-1, keepdims=True)
        return (h - mu) * jax.lax.rsqrt(var + LN_EPS) * vec(gname, n) + vec(bname, n)

    def gelu(h):  # exact erf GELU (PyTorch default)
        return 0.5 * h * (1.0 + jax.lax.erf(h * 0.7071067811865476))

    # input_norm (BatchNorm1d eval mode, folded); input_dropout = identity
    h = x * vec("bn_scale", INPUT_DIM) + vec("bn_shift", INPUT_DIM)

    # feature_embedding: Linear -> LayerNorm -> GELU
    h = dense(h, "emb", "b_emb", INPUT_DIM, ATTN_DIM)
    h = gelu(layernorm(h, "ln_emb_g", "ln_emb_b", ATTN_DIM))

    # transformer blocks (seq_len == 1)
    for b in range(NUM_BLOCKS):
        # SelfAttention: softmax over one key == 1 => context == v;
        # q/k projections are mathematically inert for this forward pass.
        res = h
        hn = layernorm(h, f"ln_a_g{b}", f"ln_a_b{b}", ATTN_DIM)
        v = dense(hn, f"v{b}", f"b_v{b}", ATTN_DIM, ATTN_DIM)
        h = dense(v, f"o{b}", f"b_o{b}", ATTN_DIM, ATTN_DIM) + res
        # FeedForward
        res = h
        hn = layernorm(h, f"ln_f_g{b}", f"ln_f_b{b}", ATTN_DIM)
        f = gelu(dense(hn, f"f1_{b}", f"b_f1_{b}", ATTN_DIM, FF_HIDDEN))
        h = dense(f, f"f2_{b}", f"b_f2_{b}", FF_HIDDEN, ATTN_DIM) + res

    # prediction head
    h = dense(h, "h1", "b_h1", ATTN_DIM, FF_HIDDEN)
    h = gelu(layernorm(h, "ln_h1_g", "ln_h1_b", FF_HIDDEN))
    h = dense(h, "h2", "b_h2", FF_HIDDEN, HALF_FF)
    h = gelu(layernorm(h, "ln_h2_g", "ln_h2_b", HALF_FF))

    # final 128 -> 1 projection on VPU/XLU (multiply + lane reduce) instead of
    # a 1-column MXU matmul.
    w_out = vec("w_out_t", HALF_FF)                       # (1, 128) f32
    logits = jnp.sum(h * w_out, axis=-1, keepdims=True) + vec("b_out", NUM_CLASSES)
    return logits                                          # (B, 1) f32


# --------------------------------- kernel ------------------------------------
def deep_tab_kernel(x_ref, w_ref, v_ref, o_ref):
    def vec(name, n):
        r = V_OFF[name]
        return v_ref[r:r + 1, :n]                          # (1, n) f32, point-of-use load

    def mat(name, k, n):
        r = W_OFF[name]
        return w_ref[r:r + k, :n]                          # (k, n) bf16, point-of-use load

    logits = _forward(x_ref[...], vec, mat)                # (B, 1) f32
    # Lane-dense store: broadcast the single logit column across 128 lanes so
    # the store is an unmasked vst; the wrapper slices back to NUM_CLASSES.
    o_ref[...] = jnp.broadcast_to(logits, o_ref.shape)


def deep_tab_attention(x, w_slab, v_slab):
    B = x.shape[0]
    out = pl.pallas_call(
        deep_tab_kernel,
        out_shape=jax.ShapeDtypeStruct((B, OUT_PAD), jnp.float32),
        # Single invocation (no grid): whole arrays resident in VMEM, one DMA
        # per input.  No double-buffering / per-step bookkeeping needed.
        in_specs=[pl.BlockSpec(memory_space=pltpu.MemorySpace.VMEM)] * 3,
        out_specs=pl.BlockSpec(memory_space=pltpu.MemorySpace.VMEM),
    )(x, w_slab, v_slab)
    return out[:, :NUM_CLASSES]


# --------------------------- pure-JAX reference -------------------------------
def reference_forward(x, w_slab, v_slab):
    def vec(name, n):
        r = V_OFF[name]
        return v_slab[r:r + 1, :n]

    def mat(name, k, n):
        r = W_OFF[name]
        return w_slab[r:r + k, :n]

    return _forward(x, vec, mat)


# --------------------------- parameter init ----------------------------------
def init_params(key):
    """Builds the two packed parameter slabs.

    Matches DeepTabAttention._init_weights: xavier_uniform for >=2-D weights,
    zeros for biases; LayerNorm gamma=1 / beta=0; BatchNorm1d eval-mode running
    stats (mean=0, var=1) folded into a per-feature scale/shift.  q/k weights
    are omitted (inert for seq_len == 1 in the forward pass)."""
    keys = iter(jax.random.split(key, 16))

    def xavier(fan_in, fan_out):
        bound = (6.0 / (fan_in + fan_out)) ** 0.5
        return jax.random.uniform(next(keys), (fan_in, fan_out),
                                  jnp.float32, -bound, bound)

    w_slab = jnp.zeros((W_ROWS, W_COLS), jnp.float32)
    v_slab = jnp.zeros((V_ROWS_PAD, V_COLS), jnp.float32)

    def put_w(name, arr):
        nonlocal w_slab
        k, n = arr.shape
        w_slab = w_slab.at[W_OFF[name]:W_OFF[name] + k, :n].set(arr)

    def put_v(name, arr):
        nonlocal v_slab
        v_slab = v_slab.at[V_OFF[name], :arr.shape[0]].set(arr)

    ones = lambda n: jnp.ones((n,), jnp.float32)
    zeros = lambda n: jnp.zeros((n,), jnp.float32)

    # input_norm: BatchNorm1d folded (gamma=1, beta=0, mean=0, var=1)
    put_v("bn_scale", jnp.full((INPUT_DIM,), 1.0 / (1.0 + BN_EPS) ** 0.5, jnp.float32))
    put_v("bn_shift", zeros(INPUT_DIM))

    # feature_embedding: Linear -> LayerNorm (-> GELU)
    put_w("emb", xavier(INPUT_DIM, ATTN_DIM))
    put_v("b_emb", zeros(ATTN_DIM))
    put_v("ln_emb_g", ones(ATTN_DIM)); put_v("ln_emb_b", zeros(ATTN_DIM))

    # transformer blocks
    for b in range(NUM_BLOCKS):
        put_v(f"ln_a_g{b}", ones(ATTN_DIM)); put_v(f"ln_a_b{b}", zeros(ATTN_DIM))
        put_w(f"v{b}", xavier(ATTN_DIM, ATTN_DIM)); put_v(f"b_v{b}", zeros(ATTN_DIM))
        put_w(f"o{b}", xavier(ATTN_DIM, ATTN_DIM)); put_v(f"b_o{b}", zeros(ATTN_DIM))
        put_v(f"ln_f_g{b}", ones(ATTN_DIM)); put_v(f"ln_f_b{b}", zeros(ATTN_DIM))
        put_w(f"f1_{b}", xavier(ATTN_DIM, FF_HIDDEN)); put_v(f"b_f1_{b}", zeros(FF_HIDDEN))
        put_w(f"f2_{b}", xavier(FF_HIDDEN, ATTN_DIM)); put_v(f"b_f2_{b}", zeros(ATTN_DIM))

    # prediction head
    put_w("h1", xavier(ATTN_DIM, FF_HIDDEN)); put_v("b_h1", zeros(FF_HIDDEN))
    put_v("ln_h1_g", ones(FF_HIDDEN)); put_v("ln_h1_b", zeros(FF_HIDDEN))
    put_w("h2", xavier(FF_HIDDEN, HALF_FF)); put_v("b_h2", zeros(HALF_FF))
    put_v("ln_h2_g", ones(HALF_FF)); put_v("ln_h2_b", zeros(HALF_FF))
    # final Linear(128 -> 1): stored transposed as a 128-wide row so the kernel
    # can do a VPU multiply + lane reduction instead of a 1-column matmul.
    put_v("w_out_t", xavier(HALF_FF, NUM_CLASSES)[:, 0])
    put_v("b_out", zeros(NUM_CLASSES))

    # bf16 weights in HBM (halves DMA bytes); vectors stay f32 (tiny, VPU math).
    return w_slab.astype(jnp.bfloat16), v_slab


# --------------------------------- main ---------------------------------------
if __name__ == "__main__":
    key = jax.random.PRNGKey(0)
    k_x, k_p = jax.random.split(key)

    x = jax.random.normal(k_x, (BATCH, INPUT_DIM), jnp.float32)
    w_slab, v_slab = init_params(k_p)

    logits = deep_tab_attention(x, w_slab, v_slab)
    logits = jax.block_until_ready(logits)
    assert logits.shape == (BATCH, NUM_CLASSES)

    # pure-JAX reference of the identical math (same bf16 weights, f32 accum)
    ref = reference_forward(x, w_slab, v_slab)
    assert jnp.allclose(logits, ref, rtol=1e-3, atol=1e-3), "mismatch vs reference"

    print("KERNEL_OK")
</pallas_src>

<mosaic_0001>
module attributes {stable_mosaic.version = 11 : i64} {
  func.func @deep_tab_kernel(%arg0: memref<16x16xf32, #tpu.memory_space<vmem>>, %arg1: memref<1680x256xbf16, #tpu.memory_space<vmem>>, %arg2: memref<32x256xf32, #tpu.memory_space<vmem>>, %arg3: memref<16x128xf32, #tpu.memory_space<vmem>>) attributes {dimension_semantics = [], scalar_prefetch = 0 : i64, scratch_operands = 0 : i64, tpu.core_type = #tpu.core_type<tc>} {
    %c0 = arith.constant 0 : index
    %c0_0 = arith.constant 0 : index
    %0 = vector.load %arg0[%c0, %c0_0] : memref<16x16xf32, #tpu.memory_space<vmem>>, vector<16x16xf32>
    %c0_1 = arith.constant 0 : index
    %c0_2 = arith.constant 0 : index
    %1 = vector.load %arg2[%c0_1, %c0_2] : memref<32x256xf32, #tpu.memory_space<vmem>>, vector<1x16xf32>
    %2 = vector.broadcast %1 : vector<1x16xf32> to vector<16x16xf32>
    %3 = arith.mulf %0, %2 : vector<16x16xf32>
    %c1 = arith.constant 1 : index
    %c0_3 = arith.constant 0 : index
    %4 = vector.load %arg2[%c1, %c0_3] : memref<32x256xf32, #tpu.memory_space<vmem>>, vector<1x16xf32>
    %5 = vector.broadcast %4 : vector<1x16xf32> to vector<16x16xf32>
    %6 = arith.addf %3, %5 : vector<16x16xf32>
    %c0_4 = arith.constant 0 : index
    %c0_5 = arith.constant 0 : index
    %7 = vector.load %arg1[%c0_4, %c0_5] : memref<1680x256xbf16, #tpu.memory_space<vmem>>, vector<16x128xbf16>
    %8 = arith.truncf %6 : vector<16x16xf32> to vector<16x16xbf16>
    %cst = arith.constant dense<0.000000e+00> : vector<16x128xf32>
    %9 = tpu.matmul %8, %7, %cst {dimension_numbers = #tpu.dot_dimension_numbers<[1], [0], [0], [1], [0, 0, 1, 1], [], []>} : vector<16x16xbf16>, vector<16x128xbf16>, vector<16x128xf32> -> vector<16x128xf32>
    %c2 = arith.constant 2 : index
    %c0_6 = arith.constant 0 : index
    %10 = vector.load %arg2[%c2, %c0_6] : memref<32x256xf32, #tpu.memory_space<vmem>>, vector<1x128xf32>
    %11 = vector.broadcast %10 : vector<1x128xf32> to vector<16x128xf32>
    %12 = arith.addf %9, %11 : vector<16x128xf32>
    %cst_7 = arith.constant dense<0.000000e+00> : vector<16xf32>
    %13 = vector.multi_reduction <add>, %12, %cst_7 [1] : vector<16x128xf32> to vector<16xf32>
    %14 = vector.shape_cast %13 : vector<16xf32> to vector<16x1xf32>
    %cst_8 = arith.constant 1.280000e+02 : f32
    %15 = vector.broadcast %cst_8 : f32 to vector<16x1xf32>
    %16 = arith.divf %14, %15 : vector<16x1xf32>
    %17 = vector.broadcast %16 : vector<16x1xf32> to vector<16x128xf32>
    %18 = arith.subf %12, %17 : vector<16x128xf32>
    %19 = arith.mulf %18, %18 : vector<16x128xf32>
    %cst_9 = arith.constant dense<0.000000e+00> : vector<16xf32>
    %20 = vector.multi_reduction <add>, %19, %cst_9 [1] : vector<16x128xf32> to vector<16xf32>
    %21 = vector.shape_cast %20 : vector<16xf32> to vector<16x1xf32>
    %cst_10 = arith.constant 1.280000e+02 : f32
    %22 = vector.broadcast %cst_10 : f32 to vector<16x1xf32>
    %23 = arith.divf %21, %22 : vector<16x1xf32>
    %24 = vector.broadcast %16 : vector<16x1xf32> to vector<16x128xf32>
    %25 = arith.subf %12, %24 : vector<16x128xf32>
    %cst_11 = arith.constant 9.99999974E-6 : f32
    %26 = vector.broadcast %cst_11 : f32 to vector<16x1xf32>
    %27 = arith.addf %23, %26 : vector<16x1xf32>
    %28 = math.rsqrt %27 : vector<16x1xf32>
    %29 = vector.broadcast %28 : vector<16x1xf32> to vector<16x128xf32>
    %30 = arith.mulf %25, %29 : vector<16x128xf32>
    %c3 = arith.constant 3 : index
    %c0_12 = arith.constant 0 : index
    %31 = vector.load %arg2[%c3, %c0_12] : memref<32x256xf32, #tpu.memory_space<vmem>>, vector<1x128xf32>
    %32 = vector.broadcast %31 : vector<1x128xf32> to vector<16x128xf32>
    %33 = arith.mulf %30, %32 : vector<16x128xf32>
    %c4 = arith.constant 4 : index
    %c0_13 = arith.constant 0 : index
    %34 = vector.load %arg2[%c4, %c0_13] : memref<32x256xf32, #tpu.memory_space<vmem>>, vector<1x128xf32>
    %35 = vector.broadcast %34 : vector<1x128xf32> to vector<16x128xf32>
    %36 = arith.addf %33, %35 : vector<16x128xf32>
    %cst_14 = arith.constant 5.000000e-01 : f32
    %37 = vector.broadcast %cst_14 : f32 to vector<16x128xf32>
    %38 = arith.mulf %37, %36 : vector<16x128xf32>
    %cst_15 = arith.constant 0.707106769 : f32
    %39 = vector.broadcast %cst_15 : f32 to vector<16x128xf32>
    %40 = arith.mulf %36, %39 : vector<16x128xf32>
    %41 = math.erf %40 : vector<16x128xf32>
    %cst_16 = arith.constant 1.000000e+00 : f32
    %42 = vector.broadcast %cst_16 : f32 to vector<16x128xf32>
    %43 = arith.addf %42, %41 : vector<16x128xf32>
    %44 = arith.mulf %38, %43 : vector<16x128xf32>
    %cst_17 = arith.constant dense<0.000000e+00> : vector<16xf32>
    %45 = vector.multi_reduction <add>, %44, %cst_17 [1] : vector<16x128xf32> to vector<16xf32>
    %46 = vector.shape_cast %45 : vector<16xf32> to vector<16x1xf32>
    %cst_18 = arith.constant 1.280000e+02 : f32
    %47 = vector.broadcast %cst_18 : f32 to vector<16x1xf32>
    %48 = arith.divf %46, %47 : vector<16x1xf32>
    %49 = vector.broadcast %48 : vector<16x1xf32> to vector<16x128xf32>
    %50 = arith.subf %44, %49 : vector<16x128xf32>
    %51 = arith.mulf %50, %50 : vector<16x128xf32>
    %cst_19 = arith.constant dense<0.000000e+00> : vector<16xf32>
    %52 = vector.multi_reduction <add>, %51, %cst_19 [1] : vector<16x128xf32> to vector<16xf32>
    %53 = vector.shape_cast %52 : vector<16xf32> to vector<16x1xf32>
    %cst_20 = arith.constant 1.280000e+02 : f32
    %54 = vector.broadcast %cst_20 : f32 to vector<16x1xf32>
    %55 = arith.divf %53, %54 : vector<16x1xf32>
    %56 = vector.broadcast %48 : vector<16x1xf32> to vector<16x128xf32>
    %57 = arith.subf %44, %56 : vector<16x128xf32>
    %cst_21 = arith.constant 9.99999974E-6 : f32
    %58 = vector.broadcast %cst_21 : f32 to vector<16x1xf32>
    %59 = arith.addf %55, %58 : vector<16x1xf32>
    %60 = math.rsqrt %59 : vector<16x1xf32>
    %61 = vector.broadcast %60 : vector<16x1xf32> to vector<16x128xf32>
    %62 = arith.mulf %57, %61 : vector<16x128xf32>
    %c5 = arith.constant 5 : index
    %c0_22 = arith.constant 0 : index
    %63 = vector.load %arg2[%c5, %c0_22] : memref<32x256xf32, #tpu.memory_space<vmem>>, vector<1x128xf32>
    %64 = vector.broadcast %63 : vector<1x128xf32> to vector<16x128xf32>
    %65 = arith.mulf %62, %64 : vector<16x128xf32>
    %c6 = arith.constant 6 : index
    %c0_23 = arith.constant 0 : index
    %66 = vector.load %arg2[%c6, %c0_23] : memref<32x256xf32, #tpu.memory_space<vmem>>, vector<1x128xf32>
    %67 = vector.broadcast %66 : vector<1x128xf32> to vector<16x128xf32>
    %68 = arith.addf %65, %67 : vector<16x128xf32>
    %c16 = arith.constant 16 : index
    %c0_24 = arith.constant 0 : index
    %69 = vector.load %arg1[%c16, %c0_24] : memref<1680x256xbf16, #tpu.memory_space<vmem>>, vector<128x128xbf16>
    %70 = arith.truncf %68 : vector<16x128xf32> to vector<16x128xbf16>
    %cst_25 = arith.constant dense<0.000000e+00> : vector<16x128xf32>
    %71 = tpu.matmul %70, %69, %cst_25 {dimension_numbers = #tpu.dot_dimension_numbers<[1], [0], [0], [1], [0, 0, 1, 1], [], []>} : vector<16x128xbf16>, vector<128x128xbf16>, vector<16x128xf32> -> vector<16x128xf32>
    %c7 = arith.constant 7 : index
    %c0_26 = arith.constant 0 : index
    %72 = vector.load %arg2[%c7, %c0_26] : memref<32x256xf32, #tpu.memory_space<vmem>>, vector<1x128xf32>
    %73 = vector.broadcast %72 : vector<1x128xf32> to vector<16x128xf32>
    %74 = arith.addf %71, %73 : vector<16x128xf32>
    %c144 = arith.constant 144 : index
    %c0_27 = arith.constant 0 : index
    %75 = vector.load %arg1[%c144, %c0_27] : memref<1680x256xbf16, #tpu.memory_space<vmem>>, vector<128x128xbf16>
    %76 = arith.truncf %74 : vector<16x128xf32> to vector<16x128xbf16>
    %cst_28 = arith.constant dense<0.000000e+00> : vector<16x128xf32>
    %77 = tpu.matmul %76, %75, %cst_28 {dimension_numbers = #tpu.dot_dimension_numbers<[1], [0], [0], [1], [0, 0, 1, 1], [], []>} : vector<16x128xbf16>, vector<128x128xbf16>, vector<16x128xf32> -> vector<16x128xf32>
    %c8 = arith.constant 8 : index
    %c0_29 = arith.constant 0 : index
    %78 = vector.load %arg2[%c8, %c0_29] : memref<32x256xf32, #tpu.memory_space<vmem>>, vector<1x128xf32>
    %79 = vector.broadcast %78 : vector<1x128xf32> to vector<16x128xf32>
    %80 = arith.addf %77, %79 : vector<16x128xf32>
    %81 = arith.addf %80, %44 : vector<16x128xf32>
    %cst_30 = arith.constant dense<0.000000e+00> : vector<16xf32>
    %82 = vector.multi_reduction <add>, %81, %cst_30 [1] : vector<16x128xf32> to vector<16xf32>
    %83 = vector.shape_cast %82 : vector<16xf32> to vector<16x1xf32>
    %cst_31 = arith.constant 1.280000e+02 : f32
    %84 = vector.broadcast %cst_31 : f32 to vector<16x1xf32>
    %85 = arith.divf %83, %84 : vector<16x1xf32>
    %86 = vector.broadcast %85 : vector<16x1xf32> to vector<16x128xf32>
    %87 = arith.subf %81, %86 : vector<16x128xf32>
    %88 = arith.mulf %87, %87 : vector<16x128xf32>
    %cst_32 = arith.constant dense<0.000000e+00> : vector<16xf32>
    %89 = vector.multi_reduction <add>, %88, %cst_32 [1] : vector<16x128xf32> to vector<16xf32>
    %90 = vector.shape_cast %89 : vector<16xf32> to vector<16x1xf32>
    %cst_33 = arith.constant 1.280000e+02 : f32
    %91 = vector.broadcast %cst_33 : f32 to vector<16x1xf32>
    %92 = arith.divf %90, %91 : vector<16x1xf32>
    %93 = vector.broadcast %85 : vector<16x1xf32> to vector<16x128xf32>
    %94 = arith.subf %81, %93 : vector<16x128xf32>
    %cst_34 = arith.constant 9.99999974E-6 : f32
    %95 = vector.broadcast %cst_34 : f32 to vector<16x1xf32>
    %96 = arith.addf %92, %95 : vector<16x1xf32>
    %97 = math.rsqrt %96 : vector<16x1xf32>
    %98 = vector.broadcast %97 : vector<16x1xf32> to vector<16x128xf32>
    %99 = arith.mulf %94, %98 : vector<16x128xf32>
    %c9 = arith.constant 9 : index
    %c0_35 = arith.constant 0 : index
    %100 = vector.load %arg2[%c9, %c0_35] : memref<32x256xf32, #tpu.memory_space<vmem>>, vector<1x128xf32>
    %101 = vector.broadcast %100 : vector<1x128xf32> to vector<16x128xf32>
    %102 = arith.mulf %99, %101 : vector<16x128xf32>
    %c10 = arith.constant 10 : index
    %c0_36 = arith.constant 0 : index
    %103 = vector.load %arg2[%c10, %c0_36] : memref<32x256xf32, #tpu.memory_space<vmem>>, vector<1x128xf32>
    %104 = vector.broadcast %103 : vector<1x128xf32> to vector<16x128xf32>
    %105 = arith.addf %102, %104 : vector<16x128xf32>
    %c272 = arith.constant 272 : index
    %c0_37 = arith.constant 0 : index
    %106 = vector.load %arg1[%c272, %c0_37] : memref<1680x256xbf16, #tpu.memory_space<vmem>>, vector<128x256xbf16>
    %107 = arith.truncf %105 : vector<16x128xf32> to vector<16x128xbf16>
    %cst_38 = arith.constant dense<0.000000e+00> : vector<16x256xf32>
    %108 = tpu.matmul %107, %106, %cst_38 {dimension_numbers = #tpu.dot_dimension_numbers<[1], [0], [0], [1], [0, 0, 1, 1], [], []>} : vector<16x128xbf16>, vector<128x256xbf16>, vector<16x256xf32> -> vector<16x256xf32>
    %c11 = arith.constant 11 : index
    %c0_39 = arith.constant 0 : index
    %109 = vector.load %arg2[%c11, %c0_39] : memref<32x256xf32, #tpu.memory_space<vmem>>, vector<1x256xf32>
    %110 = vector.broadcast %109 : vector<1x256xf32> to vector<16x256xf32>
    %111 = arith.addf %108, %110 : vector<16x256xf32>
    %cst_40 = arith.constant 5.000000e-01 : f32
    %112 = vector.broadcast %cst_40 : f32 to vector<16x256xf32>
    %113 = arith.mulf %112, %111 : vector<16x256xf32>
    %cst_41 = arith.constant 0.707106769 : f32
    %114 = vector.broadcast %cst_41 : f32 to vector<16x256xf32>
    %115 = arith.mulf %111, %114 : vector<16x256xf32>
    %116 = math.erf %115 : vector<16x256xf32>
    %cst_42 = arith.constant 1.000000e+00 : f32
    %117 = vector.broadcast %cst_42 : f32 to vector<16x256xf32>
    %118 = arith.addf %117, %116 : vector<16x256xf32>
    %119 = arith.mulf %113, %118 : vector<16x256xf32>
    %c400 = arith.constant 400 : index
    %c0_43 = arith.constant 0 : index
    %120 = vector.load %arg1[%c400, %c0_43] : memref<1680x256xbf16, #tpu.memory_space<vmem>>, vector<256x128xbf16>
    %121 = arith.truncf %119 : vector<16x256xf32> to vector<16x256xbf16>
    %cst_44 = arith.constant dense<0.000000e+00> : vector<16x128xf32>
    %122 = tpu.matmul %121, %120, %cst_44 {dimension_numbers = #tpu.dot_dimension_numbers<[1], [0], [0], [1], [0, 0, 1, 1], [], []>} : vector<16x256xbf16>, vector<256x128xbf16>, vector<16x128xf32> -> vector<16x128xf32>
    %c12 = arith.constant 12 : index
    %c0_45 = arith.constant 0 : index
    %123 = vector.load %arg2[%c12, %c0_45] : memref<32x256xf32, #tpu.memory_space<vmem>>, vector<1x128xf32>
    %124 = vector.broadcast %123 : vector<1x128xf32> to vector<16x128xf32>
    %125 = arith.addf %122, %124 : vector<16x128xf32>
    %126 = arith.addf %125, %81 : vector<16x128xf32>
    %cst_46 = arith.constant dense<0.000000e+00> : vector<16xf32>
    %127 = vector.multi_reduction <add>, %126, %cst_46 [1] : vector<16x128xf32> to vector<16xf32>
    %128 = vector.shape_cast %127 : vector<16xf32> to vector<16x1xf32>
    %cst_47 = arith.constant 1.280000e+02 : f32
    %129 = vector.broadcast %cst_47 : f32 to vector<16x1xf32>
    %130 = arith.divf %128, %129 : vector<16x1xf32>
    %131 = vector.broadcast %130 : vector<16x1xf32> to vector<16x128xf32>
    %132 = arith.subf %126, %131 : vector<16x128xf32>
    %133 = arith.mulf %132, %132 : vector<16x128xf32>
    %cst_48 = arith.constant dense<0.000000e+00> : vector<16xf32>
    %134 = vector.multi_reduction <add>, %133, %cst_48 [1] : vector<16x128xf32> to vector<16xf32>
    %135 = vector.shape_cast %134 : vector<16xf32> to vector<16x1xf32>
    %cst_49 = arith.constant 1.280000e+02 : f32
    %136 = vector.broadcast %cst_49 : f32 to vector<16x1xf32>
    %137 = arith.divf %135, %136 : vector<16x1xf32>
    %138 = vector.broadcast %130 : vector<16x1xf32> to vector<16x128xf32>
    %139 = arith.subf %126, %138 : vector<16x128xf32>
    %cst_50 = arith.constant 9.99999974E-6 : f32
    %140 = vector.broadcast %cst_50 : f32 to vector<16x1xf32>
    %141 = arith.addf %137, %140 : vector<16x1xf32>
    %142 = math.rsqrt %141 : vector<16x1xf32>
    %143 = vector.broadcast %142 : vector<16x1xf32> to vector<16x128xf32>
    %144 = arith.mulf %139, %143 : vector<16x128xf32>
    %c13 = arith.constant 13 : index
    %c0_51 = arith.constant 0 : index
    %145 = vector.load %arg2[%c13, %c0_51] : memref<32x256xf32, #tpu.memory_space<vmem>>, vector<1x128xf32>
    %146 = vector.broadcast %145 : vector<1x128xf32> to vector<16x128xf32>
    %147 = arith.mulf %144, %146 : vector<16x128xf32>
    %c14 = arith.constant 14 : index
    %c0_52 = arith.constant 0 : index
    %148 = vector.load %arg2[%c14, %c0_52] : memref<32x256xf32, #tpu.memory_space<vmem>>, vector<1x128xf32>
    %149 = vector.broadcast %148 : vector<1x128xf32> to vector<16x128xf32>
    %150 = arith.addf %147, %149 : vector<16x128xf32>
    %c656 = arith.constant 656 : index
    %c0_53 = arith.constant 0 : index
    %151 = vector.load %arg1[%c656, %c0_53] : memref<1680x256xbf16, #tpu.memory_space<vmem>>, vector<128x128xbf16>
    %152 = arith.truncf %150 : vector<16x128xf32> to vector<16x128xbf16>
    %cst_54 = arith.constant dense<0.000000e+00> : vector<16x128xf32>
    %153 = tpu.matmul %152, %151, %cst_54 {dimension_numbers = #tpu.dot_dimension_numbers<[1], [0], [0], [1], [0, 0, 1, 1], [], []>} : vector<16x128xbf16>, vector<128x128xbf16>, vector<16x128xf32> -> vector<16x128xf32>
    %c15 = arith.constant 15 : index
    %c0_55 = arith.constant 0 : index
    %154 = vector.load %arg2[%c15, %c0_55] : memref<32x256xf32, #tpu.memory_space<vmem>>, vector<1x128xf32>
    %155 = vector.broadcast %154 : vector<1x128xf32> to vector<16x128xf32>
    %156 = arith.addf %153, %155 : vector<16x128xf32>
    %c784 = arith.constant 784 : index
    %c0_56 = arith.constant 0 : index
    %157 = vector.load %arg1[%c784, %c0_56] : memref<1680x256xbf16, #tpu.memory_space<vmem>>, vector<128x128xbf16>
    %158 = arith.truncf %156 : vector<16x128xf32> to vector<16x128xbf16>
    %cst_57 = arith.constant dense<0.000000e+00> : vector<16x128xf32>
    %159 = tpu.matmul %158, %157, %cst_57 {dimension_numbers = #tpu.dot_dimension_numbers<[1], [0], [0], [1], [0, 0, 1, 1], [], []>} : vector<16x128xbf16>, vector<128x128xbf16>, vector<16x128xf32> -> vector<16x128xf32>
    %c16_58 = arith.constant 16 : index
    %c0_59 = arith.constant 0 : index
    %160 = vector.load %arg2[%c16_58, %c0_59] : memref<32x256xf32, #tpu.memory_space<vmem>>, vector<1x128xf32>
    %161 = vector.broadcast %160 : vector<1x128xf32> to vector<16x128xf32>
    %162 = arith.addf %159, %161 : vector<16x128xf32>
    %163 = arith.addf %162, %126 : vector<16x128xf32>
    %cst_60 = arith.constant dense<0.000000e+00> : vector<16xf32>
    %164 = vector.multi_reduction <add>, %163, %cst_60 [1] : vector<16x128xf32> to vector<16xf32>
    %165 = vector.shape_cast %164 : vector<16xf32> to vector<16x1xf32>
    %cst_61 = arith.constant 1.280000e+02 : f32
    %166 = vector.broadcast %cst_61 : f32 to vector<16x1xf32>
    %167 = arith.divf %165, %166 : vector<16x1xf32>
    %168 = vector.broadcast %167 : vector<16x1xf32> to vector<16x128xf32>
    %169 = arith.subf %163, %168 : vector<16x128xf32>
    %170 = arith.mulf %169, %169 : vector<16x128xf32>
    %cst_62 = arith.constant dense<0.000000e+00> : vector<16xf32>
    %171 = vector.multi_reduction <add>, %170, %cst_62 [1] : vector<16x128xf32> to vector<16xf32>
    %172 = vector.shape_cast %171 : vector<16xf32> to vector<16x1xf32>
    %cst_63 = arith.constant 1.280000e+02 : f32
    %173 = vector.broadcast %cst_63 : f32 to vector<16x1xf32>
    %174 = arith.divf %172, %173 : vector<16x1xf32>
    %175 = vector.broadcast %167 : vector<16x1xf32> to vector<16x128xf32>
    %176 = arith.subf %163, %175 : vector<16x128xf32>
    %cst_64 = arith.constant 9.99999974E-6 : f32
    %177 = vector.broadcast %cst_64 : f32 to vector<16x1xf32>
    %178 = arith.addf %174, %177 : vector<16x1xf32>
    %179 = math.rsqrt %178 : vector<16x1xf32>
    %180 = vector.broadcast %179 : vector<16x1xf32> to vector<16x128xf32>
    %181 = arith.mulf %176, %180 : vector<16x128xf32>
    %c17 = arith.constant 17 : index
    %c0_65 = arith.constant 0 : index
    %182 = vector.load %arg2[%c17, %c0_65] : memref<32x256xf32, #tpu.memory_space<vmem>>, vector<1x128xf32>
    %183 = vector.broadcast %182 : vector<1x128xf32> to vector<16x128xf32>
    %184 = arith.mulf %181, %183 : vector<16x128xf32>
    %c18 = arith.constant 18 : index
    %c0_66 = arith.constant 0 : index
    %185 = vector.load %arg2[%c18, %c0_66] : memref<32x256xf32, #tpu.memory_space<vmem>>, vector<1x128xf32>
    %186 = vector.broadcast %185 : vector<1x128xf32> to vector<16x128xf32>
    %187 = arith.addf %184, %186 : vector<16x128xf32>
    %c912 = arith.constant 912 : index
    %c0_67 = arith.constant 0 : index
    %188 = vector.load %arg1[%c912, %c0_67] : memref<1680x256xbf16, #tpu.memory_space<vmem>>, vector<128x256xbf16>
    %189 = arith.truncf %187 : vector<16x128xf32> to vector<16x128xbf16>
    %cst_68 = arith.constant dense<0.000000e+00> : vector<16x256xf32>
    %190 = tpu.matmul %189, %188, %cst_68 {dimension_numbers = #tpu.dot_dimension_numbers<[1], [0], [0], [1], [0, 0, 1, 1], [], []>} : vector<16x128xbf16>, vector<128x256xbf16>, vector<16x256xf32> -> vector<16x256xf32>
    %c19 = arith.constant 19 : index
    %c0_69 = arith.constant 0 : index
    %191 = vector.load %arg2[%c19, %c0_69] : memref<32x256xf32, #tpu.memory_space<vmem>>, vector<1x256xf32>
    %192 = vector.broadcast %191 : vector<1x256xf32> to vector<16x256xf32>
    %193 = arith.addf %190, %192 : vector<16x256xf32>
    %cst_70 = arith.constant 5.000000e-01 : f32
    %194 = vector.broadcast %cst_70 : f32 to vector<16x256xf32>
    %195 = arith.mulf %194, %193 : vector<16x256xf32>
    %cst_71 = arith.constant 0.707106769 : f32
    %196 = vector.broadcast %cst_71 : f32 to vector<16x256xf32>
    %197 = arith.mulf %193, %196 : vector<16x256xf32>
    %198 = math.erf %197 : vector<16x256xf32>
    %cst_72 = arith.constant 1.000000e+00 : f32
    %199 = vector.broadcast %cst_72 : f32 to vector<16x256xf32>
    %200 = arith.addf %199, %198 : vector<16x256xf32>
    %201 = arith.mulf %195, %200 : vector<16x256xf32>
    %c1040 = arith.constant 1040 : index
    %c0_73 = arith.constant 0 : index
    %202 = vector.load %arg1[%c1040, %c0_73] : memref<1680x256xbf16, #tpu.memory_space<vmem>>, vector<256x128xbf16>
    %203 = arith.truncf %201 : vector<16x256xf32> to vector<16x256xbf16>
    %cst_74 = arith.constant dense<0.000000e+00> : vector<16x128xf32>
    %204 = tpu.matmul %203, %202, %cst_74 {dimension_numbers = #tpu.dot_dimension_numbers<[1], [0], [0], [1], [0, 0, 1, 1], [], []>} : vector<16x256xbf16>, vector<256x128xbf16>, vector<16x128xf32> -> vector<16x128xf32>
    %c20 = arith.constant 20 : index
    %c0_75 = arith.constant 0 : index
    %205 = vector.load %arg2[%c20, %c0_75] : memref<32x256xf32, #tpu.memory_space<vmem>>, vector<1x128xf32>
    %206 = vector.broadcast %205 : vector<1x128xf32> to vector<16x128xf32>
    %207 = arith.addf %204, %206 : vector<16x128xf32>
    %208 = arith.addf %207, %163 : vector<16x128xf32>
    %c1296 = arith.constant 1296 : index
    %c0_76 = arith.constant 0 : index
    %209 = vector.load %arg1[%c1296, %c0_76] : memref<1680x256xbf16, #tpu.memory_space<vmem>>, vector<128x256xbf16>
    %210 = arith.truncf %208 : vector<16x128xf32> to vector<16x128xbf16>
    %cst_77 = arith.constant dense<0.000000e+00> : vector<16x256xf32>
    %211 = tpu.matmul %210, %209, %cst_77 {dimension_numbers = #tpu.dot_dimension_numbers<[1], [0], [0], [1], [0, 0, 1, 1], [], []>} : vector<16x128xbf16>, vector<128x256xbf16>, vector<16x256xf32> -> vector<16x256xf32>
    %c21 = arith.constant 21 : index
    %c0_78 = arith.constant 0 : index
    %212 = vector.load %arg2[%c21, %c0_78] : memref<32x256xf32, #tpu.memory_space<vmem>>, vector<1x256xf32>
    %213 = vector.broadcast %212 : vector<1x256xf32> to vector<16x256xf32>
    %214 = arith.addf %211, %213 : vector<16x256xf32>
    %cst_79 = arith.constant dense<0.000000e+00> : vector<16xf32>
    %215 = vector.multi_reduction <add>, %214, %cst_79 [1] : vector<16x256xf32> to vector<16xf32>
    %216 = vector.shape_cast %215 : vector<16xf32> to vector<16x1xf32>
    %cst_80 = arith.constant 2.560000e+02 : f32
    %217 = vector.broadcast %cst_80 : f32 to vector<16x1xf32>
    %218 = arith.divf %216, %217 : vector<16x1xf32>
    %219 = vector.broadcast %218 : vector<16x1xf32> to vector<16x256xf32>
    %220 = arith.subf %214, %219 : vector<16x256xf32>
    %221 = arith.mulf %220, %220 : vector<16x256xf32>
    %cst_81 = arith.constant dense<0.000000e+00> : vector<16xf32>
    %222 = vector.multi_reduction <add>, %221, %cst_81 [1] : vector<16x256xf32> to vector<16xf32>
    %223 = vector.shape_cast %222 : vector<16xf32> to vector<16x1xf32>
    %cst_82 = arith.constant 2.560000e+02 : f32
    %224 = vector.broadcast %cst_82 : f32 to vector<16x1xf32>
    %225 = arith.divf %223, %224 : vector<16x1xf32>
    %226 = vector.broadcast %218 : vector<16x1xf32> to vector<16x256xf32>
    %227 = arith.subf %214, %226 : vector<16x256xf32>
    %cst_83 = arith.constant 9.99999974E-6 : f32
    %228 = vector.broadcast %cst_83 : f32 to vector<16x1xf32>
    %229 = arith.addf %225, %228 : vector<16x1xf32>
    %230 = math.rsqrt %229 : vector<16x1xf32>
    %231 = vector.broadcast %230 : vector<16x1xf32> to vector<16x256xf32>
    %232 = arith.mulf %227, %231 : vector<16x256xf32>
    %c22 = arith.constant 22 : index
    %c0_84 = arith.constant 0 : index
    %233 = vector.load %arg2[%c22, %c0_84] : memref<32x256xf32, #tpu.memory_space<vmem>>, vector<1x256xf32>
    %234 = vector.broadcast %233 : vector<1x256xf32> to vector<16x256xf32>
    %235 = arith.mulf %232, %234 : vector<16x256xf32>
    %c23 = arith.constant 23 : index
    %c0_85 = arith.constant 0 : index
    %236 = vector.load %arg2[%c23, %c0_85] : memref<32x256xf32, #tpu.memory_space<vmem>>, vector<1x256xf32>
    %237 = vector.broadcast %236 : vector<1x256xf32> to vector<16x256xf32>
    %238 = arith.addf %235, %237 : vector<16x256xf32>
    %cst_86 = arith.constant 5.000000e-01 : f32
    %239 = vector.broadcast %cst_86 : f32 to vector<16x256xf32>
    %240 = arith.mulf %239, %238 : vector<16x256xf32>
    %cst_87 = arith.constant 0.707106769 : f32
    %241 = vector.broadcast %cst_87 : f32 to vector<16x256xf32>
    %242 = arith.mulf %238, %241 : vector<16x256xf32>
    %243 = math.erf %242 : vector<16x256xf32>
    %cst_88 = arith.constant 1.000000e+00 : f32
    %244 = vector.broadcast %cst_88 : f32 to vector<16x256xf32>
    %245 = arith.addf %244, %243 : vector<16x256xf32>
    %246 = arith.mulf %240, %245 : vector<16x256xf32>
    %c1424 = arith.constant 1424 : index
    %c0_89 = arith.constant 0 : index
    %247 = vector.load %arg1[%c1424, %c0_89] : memref<1680x256xbf16, #tpu.memory_space<vmem>>, vector<256x128xbf16>
    %248 = arith.truncf %246 : vector<16x256xf32> to vector<16x256xbf16>
    %cst_90 = arith.constant dense<0.000000e+00> : vector<16x128xf32>
    %249 = tpu.matmul %248, %247, %cst_90 {dimension_numbers = #tpu.dot_dimension_numbers<[1], [0], [0], [1], [0, 0, 1, 1], [], []>} : vector<16x256xbf16>, vector<256x128xbf16>, vector<16x128xf32> -> vector<16x128xf32>
    %c24 = arith.constant 24 : index
    %c0_91 = arith.constant 0 : index
    %250 = vector.load %arg2[%c24, %c0_91] : memref<32x256xf32, #tpu.memory_space<vmem>>, vector<1x128xf32>
    %251 = vector.broadcast %250 : vector<1x128xf32> to vector<16x128xf32>
    %252 = arith.addf %249, %251 : vector<16x128xf32>
    %cst_92 = arith.constant dense<0.000000e+00> : vector<16xf32>
    %253 = vector.multi_reduction <add>, %252, %cst_92 [1] : vector<16x128xf32> to vector<16xf32>
    %254 = vector.shape_cast %253 : vector<16xf32> to vector<16x1xf32>
    %cst_93 = arith.constant 1.280000e+02 : f32
    %255 = vector.broadcast %cst_93 : f32 to vector<16x1xf32>
    %256 = arith.divf %254, %255 : vector<16x1xf32>
    %257 = vector.broadcast %256 : vector<16x1xf32> to vector<16x128xf32>
    %258 = arith.subf %252, %257 : vector<16x128xf32>
    %259 = arith.mulf %258, %258 : vector<16x128xf32>
    %cst_94 = arith.constant dense<0.000000e+00> : vector<16xf32>
    %260 = vector.multi_reduction <add>, %259, %cst_94 [1] : vector<16x128xf32> to vector<16xf32>
    %261 = vector.shape_cast %260 : vector<16xf32> to vector<16x1xf32>
    %cst_95 = arith.constant 1.280000e+02 : f32
    %262 = vector.broadcast %cst_95 : f32 to vector<16x1xf32>
    %263 = arith.divf %261, %262 : vector<16x1xf32>
    %264 = vector.broadcast %256 : vector<16x1xf32> to vector<16x128xf32>
    %265 = arith.subf %252, %264 : vector<16x128xf32>
    %cst_96 = arith.constant 9.99999974E-6 : f32
    %266 = vector.broadcast %cst_96 : f32 to vector<16x1xf32>
    %267 = arith.addf %263, %266 : vector<16x1xf32>
    %268 = math.rsqrt %267 : vector<16x1xf32>
    %269 = vector.broadcast %268 : vector<16x1xf32> to vector<16x128xf32>
    %270 = arith.mulf %265, %269 : vector<16x128xf32>
    %c25 = arith.constant 25 : index
    %c0_97 = arith.constant 0 : index
    %271 = vector.load %arg2[%c25, %c0_97] : memref<32x256xf32, #tpu.memory_space<vmem>>, vector<1x128xf32>
    %272 = vector.broadcast %271 : vector<1x128xf32> to vector<16x128xf32>
    %273 = arith.mulf %270, %272 : vector<16x128xf32>
    %c26 = arith.constant 26 : index
    %c0_98 = arith.constant 0 : index
    %274 = vector.load %arg2[%c26, %c0_98] : memref<32x256xf32, #tpu.memory_space<vmem>>, vector<1x128xf32>
    %275 = vector.broadcast %274 : vector<1x128xf32> to vector<16x128xf32>
    %276 = arith.addf %273, %275 : vector<16x128xf32>
    %cst_99 = arith.constant 5.000000e-01 : f32
    %277 = vector.broadcast %cst_99 : f32 to vector<16x128xf32>
    %278 = arith.mulf %277, %276 : vector<16x128xf32>
    %cst_100 = arith.constant 0.707106769 : f32
    %279 = vector.broadcast %cst_100 : f32 to vector<16x128xf32>
    %280 = arith.mulf %276, %279 : vector<16x128xf32>
    %281 = math.erf %280 : vector<16x128xf32>
    %cst_101 = arith.constant 1.000000e+00 : f32
    %282 = vector.broadcast %cst_101 : f32 to vector<16x128xf32>
    %283 = arith.addf %282, %281 : vector<16x128xf32>
    %284 = arith.mulf %278, %283 : vector<16x128xf32>
    %c27 = arith.constant 27 : index
    %c0_102 = arith.constant 0 : index
    %285 = vector.load %arg2[%c27, %c0_102] : memref<32x256xf32, #tpu.memory_space<vmem>>, vector<1x128xf32>
    %286 = vector.broadcast %285 : vector<1x128xf32> to vector<16x128xf32>
    %287 = arith.mulf %284, %286 : vector<16x128xf32>
    %cst_103 = arith.constant dense<0.000000e+00> : vector<16xf32>
    %288 = vector.multi_reduction <add>, %287, %cst_103 [1] : vector<16x128xf32> to vector<16xf32>
    %289 = vector.shape_cast %288 : vector<16xf32> to vector<16x1xf32>
    %c28 = arith.constant 28 : index
    %c0_104 = arith.constant 0 : index
    %290 = vector.load %arg2[%c28, %c0_104] : memref<32x256xf32, #tpu.memory_space<vmem>>, vector<1x1xf32>
    %291 = vector.broadcast %290 : vector<1x1xf32> to vector<16x1xf32>
    %292 = arith.addf %289, %291 : vector<16x1xf32>
    %293 = vector.shape_cast %292 : vector<16x1xf32> to vector<16x1xf32>
    %294 = vector.broadcast %293 : vector<16x1xf32> to vector<16x128xf32>
    %c0_105 = arith.constant 0 : index
    %c0_106 = arith.constant 0 : index
    %295 = vector.load %arg3[%c0_105, %c0_106] : memref<16x128xf32, #tpu.memory_space<vmem>>, vector<16x128xf32>
    tpu.vector_store %arg3[%c0_105, %c0_106], %294 {strides = array<i32>} : memref<16x128xf32, #tpu.memory_space<vmem>>, vector<16x128xf32>,
    return
  }
}

</mosaic_0001>

<llo_original>
// kernel: tpu_custom_call.1
$region0: #{tpu_custom_call.1}
  #allocation0 [shape = 'u32[]', space=smem, size = 0x4, offset = 0x4, fixed_abs, tag = 'smem constant byte address 0x4 - core index']
  #allocation1 [shape = 'u32[144,128]{1,0:T(1,128)}', space=vmem, size = 0x12000, scoped, tag = 'internal scratch']
  %s0 = inlined_call_operand.hbm [shape: f32[16,16], index: 0, kind: input, shape index: {}]
  %s1 = inlined_call_operand.hbm [shape: bf16[1680,256], index: 1, kind: input, shape index: {}]
  %s2 = inlined_call_operand.hbm [shape: f32[32,256], index: 2, kind: input, shape index: {}]
  %s3 = inlined_call_operand.hbm [shape: f32[16,128], index: 3, kind: output, shape index: {}]
  %s4 = sld [smem:[#allocation0]]
  $region34: #{tpu_custom_call.1} parent=0
    _
  %s6 = ssub.s32 1, %s4
  %s7 = scalar_select 0, %s6, %s4
  $region1: #{tpu_custom_call.1} parent=0
    #allocation2 [shape = 'u8[8192]{0}', space=vmem, size = 0x2000, scoped, tag = 'input window, operand 0, single buffered']
    #allocation3 [shape = 's32[1]{0}', space=sflag, size = 0x4, scoped, tag = 'scoped memory for tpu_custom_call.1']
    #allocation4 [shape = 's32[1]{0}', space=sflag, size = 0x4, scoped, tag = 'scoped memory for tpu_custom_call.1']
    #allocation5 [shape = 'u8[860160]{0}', space=vmem, size = 0xd2000, scoped, tag = 'input window, operand 1, single buffered']
    #allocation6 [shape = 's32[1]{0}', space=sflag, size = 0x4, scoped, tag = 'scoped memory for tpu_custom_call.1']
    #allocation7 [shape = 'u8[32768]{0}', space=vmem, size = 0x8000, scoped, tag = 'input window, operand 2, single buffered']
    #allocation8 [shape = 'u8[8192]{0}', space=vmem, size = 0x2000, scoped, tag = 'output window, operand 0, single buffered']
    %8 = vsyncpa [#allocation3], 0
    %9 = vsyncpa [#allocation6], 0
    %10 = vsyncpa [#allocation4], 0
    // Predicated region
    $region2: #{tpu_custom_call.1} parent=1 // pred_check
      _
    $region3: #{tpu_custom_call.1} parent=1 // pred_check_branch
      %12 = sbr.rel (0) target = $region5
    $region4: #{tpu_custom_call.1} parent=1 // pred_region
      %s14 = ssub.s32 256, 256
      %15 = vsyncadd [#allocation3], %s14
      %s16 = sshll.u32 [#allocation2], 4
      %s17 = int_to_ptr.vmem [resolvable:$true] %s16
      %22 = dma.hbm_to_vmem [thread:$0]  %s0, 256, %s17, [#allocation3], 128, 128, 8
    $region5: #{tpu_custom_call.1} parent=1 // pred_fallthru
      _
    // Predicated region
    $region6: #{tpu_custom_call.1} parent=1 // pred_check
      _
    $region7: #{tpu_custom_call.1} parent=1 // pred_check_branch
      %24 = sbr.rel (0) target = $region9
    $region8: #{tpu_custom_call.1} parent=1 // pred_region
      %s26 = ssub.s32 26880, 26880
      %27 = vsyncadd [#allocation6], %s26
      %s28 = sshll.u32 [#allocation5], 4
      %s29 = int_to_ptr.vmem [resolvable:$true] %s28
      %34 = dma.hbm_to_vmem [thread:$0]  %s1, 26880, %s29, [#allocation6], 128, 128, 8
    $region9: #{tpu_custom_call.1} parent=1 // pred_fallthru
      _
    // Predicated region
    $region10: #{tpu_custom_call.1} parent=1 // pred_check
      _
    $region11: #{tpu_custom_call.1} parent=1 // pred_check_branch
      %36 = sbr.rel (0) target = $region13
    $region12: #{tpu_custom_call.1} parent=1 // pred_region
      %s38 = ssub.s32 1024, 1024
      %39 = vsyncadd [#allocation6], %s38
      %s40 = sshll.u32 [#allocation7], 4
      %s41 = int_to_ptr.vmem [resolvable:$true] %s40
      %46 = dma.hbm_to_vmem [thread:$0]  %s2, 1024, %s41, [#allocation6], 256, 256, 16
    $region13: #{tpu_custom_call.1} parent=1 // pred_fallthru
      _
    // Predicated region
    $region14: #{tpu_custom_call.1} parent=1 // pred_check
      _
    $region15: #{tpu_custom_call.1} parent=1 // pred_check_branch
      %48 = sbr.rel (0) target = $region17
    $region16: #{tpu_custom_call.1} parent=1 // pred_region
      %49 = dma.done [#allocation3], 256
    $region17: #{tpu_custom_call.1} parent=1 // pred_fallthru
      _
    // Predicated region
    $region18: #{tpu_custom_call.1} parent=1 // pred_check
      _
    $region19: #{tpu_custom_call.1} parent=1 // pred_check_branch
      %51 = sbr.rel (0) target = $region21
    $region20: #{tpu_custom_call.1} parent=1 // pred_region
      %52 = dma.done [#allocation6], 26880
    $region21: #{tpu_custom_call.1} parent=1 // pred_fallthru
      _
    // Predicated region
    $region22: #{tpu_custom_call.1} parent=1 // pred_check
      _
    $region23: #{tpu_custom_call.1} parent=1 // pred_check_branch
      %54 = sbr.rel (0) target = $region25
    $region24: #{tpu_custom_call.1} parent=1 // pred_region
      %55 = dma.done [#allocation6], 1024
    $region25: #{tpu_custom_call.1} parent=1 // pred_fallthru
      _
    %v57 = vld [vmem:[#allocation2] sm:$0xff]
    %v58 = vld [vmem:[#allocation2 + $0x8] sm:$0xff]
    %v59 = vld [vmem:[#allocation7] ss:$0 sm:$0xff]
    %v60 = vmul.f32 %v57, %v59
    %v61 = vmul.f32 %v58, %v59
    %v62 = vld [vmem:[#allocation7 + $0x1] ss:$0 sm:$0xff]
    %v63 = vadd.f32 %v60, %v62
    %v64 = vadd.f32 %v61, %v62
    %v65 = vld [vmem:[#allocation5] sm:$0xf]
    %v66 = vld [vmem:[#allocation5 + $0x8] sm:$0xf]
    %v67 = vpack.c.bf16 %v64, %v63
    %v68 = vld [vmem:[#allocation7 + $0x2] ss:$0 sm:$0xff]
    %v71 = vunpack.c.l.b16 %v65
    %v72 = vunpack.c.l.b16 %v66
    %v73 = vpack.c.b16 %v72, %v71
    %vm75 = vcmask 130048
    %v77 = vsel %vm75, %v67, 0
    %79 = vmatprep.subr.bf16.mxu0 0
    %80 = vmatpush1.bf16.msra.mxu0 %v73
    %81 = vmatprep.subr.bf16.mxu0 0
    %82 = vmatpush1.bf16.msra.mxu0 0
    %83 = vmatprep.subr.bf16.mxu0 0
    %84 = vmatpush1.bf16.msra.mxu0 0
    %85 = vmatprep.subr.bf16.mxu0 0
    %86 = vmatpush1.bf16.msra.mxu0 0
    %87 = vmatprep.subr.bf16.mxu0 0
    %88 = vmatpush1.bf16.msra.mxu0 0
    %89 = vmatprep.subr.bf16.mxu0 0
    %90 = vmatpush1.bf16.msra.mxu0 0
    %91 = vmatprep.subr.bf16.mxu0 0
    %92 = vmatpush1.bf16.msra.mxu0 0
    %93 = vmatprep.subr.bf16.mxu0 0
    %94 = vmatpush1.bf16.msra.mxu0 0
    %95 = vmatprep.subr.bf16.mxu0 0
    %96 = vmatpush1.bf16.msra.mxu0 0
    %97 = vmatprep.subr.bf16.mxu0 0
    %98 = vmatpush1.bf16.msra.mxu0 0
    %99 = vmatprep.subr.bf16.mxu0 0
    %100 = vmatpush1.bf16.msra.mxu0 0
    %101 = vmatprep.subr.bf16.mxu0 0
    %102 = vmatpush1.bf16.msra.mxu0 0
    %103 = vmatprep.subr.bf16.mxu0 0
    %104 = vmatpush1.bf16.msra.mxu0 0
    %105 = vmatprep.subr.bf16.mxu0 0
    %106 = vmatpush1.bf16.msra.mxu0 0
    %107 = vmatprep.subr.bf16.mxu0 0
    %108 = vmatpush1.bf16.msra.mxu0 0
    %109 = vmatprep.subr.bf16.mxu0 0
    %110 = vmatpush1.bf16.msra.mxu0 0
    %111 = vmatprep.mubr.bf16.mxu0 0
    %112 = vmatmul.mubr.bf16.gmra.mrb[0].mxu0 %v77
    %v113 = vpop.f32.mrb[0].mxu0
    %v114 = vadd.f32 %v68, %v113
    %v115 = vpop.f32.mrb[0].mxu0
    %v116 = vpop.f32.mrb[0].mxu0
    %v117 = vadd.f32 %v68, %v116
    %v118 = vpop.f32.mrb[0].mxu0
    %119 = vdwg.mxu0
    %120 = vadd.xlane.f32.xlu0 %v114
    %v121 = vpop.xlane.xlu0 %120
    %122 = vadd.xlane.f32.xlu0 %v117
    %v123 = vpop.xlane.xlu0 %122
    %v124 = vrcp.pop 128.0
    %v125 = vmul.f32 %v121, %v124
    %v126 = vmul.f32 %v123, %v124
    %v127 = vsub.f32 %v114, %v125
    %v128 = vsub.f32 %v117, %v126
    %v129 = vmul.f32 %v127, %v127
    %v130 = vmul.f32 %v128, %v128
    %131 = vadd.xlane.f32.xlu0 %v129
    %v132 = vpop.xlane.xlu0 %131
    %133 = vadd.xlane.f32.xlu0 %v130
    %v134 = vpop.xlane.xlu0 %133
    %v135 = vmul.f32 %v132, %v124
    %v136 = vmul.f32 %v134, %v124
    %v137 = vadd.f32 %v135, 1e-05
    %v138 = vadd.f32 %v136, 1e-05
    %v139 = vrsqrt.pop %v137
    %v140 = vrsqrt.pop %v138
    %v141 = vmul.f32 %v127, %v139
    %v142 = vmul.f32 %v128, %v140
    %v143 = vld [vmem:[#allocation7 + $0x3] ss:$0 sm:$0xff]
    %v144 = vmul.f32 %v141, %v143
    %v145 = vmul.f32 %v142, %v143
    %v146 = vld [vmem:[#allocation7 + $0x4] ss:$0 sm:$0xff]
    %v147 = vadd.f32 %v144, %v146
    %v148 = vadd.f32 %v145, %v146
    %v149 = vmul.f32 %v147, 0.5
    %v150 = vmul.f32 %v148, 0.5
    %v151 = vmul.f32 %v147, 0.70710677
    %v152 = vmul.f32 %v148, 0.70710677
    %v153 = verf.f32.pop %v151
    %v154 = verf.f32.pop %v152
    %v155 = vadd.f32 %v153, 1.0
    %v156 = vadd.f32 %v154, 1.0
    %v157 = vmul.f32 %v149, %v155
    %v158 = vmul.f32 %v150, %v156
    %159 = vadd.xlane.f32.xlu0 %v157
    %v160 = vpop.xlane.xlu0 %159
    %161 = vadd.xlane.f32.xlu0 %v158
    %v162 = vpop.xlane.xlu0 %161
    %v163 = vmul.f32 %v160, %v124
    %v164 = vmul.f32 %v162, %v124
    %v165 = vsub.f32 %v157, %v163
    %v166 = vsub.f32 %v158, %v164
    %v167 = vmul.f32 %v165, %v165
    %v168 = vmul.f32 %v166, %v166
    %169 = vadd.xlane.f32.xlu0 %v167
    %v170 = vpop.xlane.xlu0 %169
    %171 = vadd.xlane.f32.xlu0 %v168
    %v172 = vpop.xlane.xlu0 %171
    %v173 = vmul.f32 %v170, %v124
    %v174 = vmul.f32 %v172, %v124
    %v175 = vadd.f32 %v173, 1e-05
    %v176 = vadd.f32 %v174, 1e-05
    %v177 = vrsqrt.pop %v175
    %v178 = vrsqrt.pop %v176
    %v179 = vmul.f32 %v165, %v177
    %v180 = vmul.f32 %v166, %v178
    %v181 = vld [vmem:[#allocation7 + $0x5] ss:$0 sm:$0xff]
    %v182 = vmul.f32 %v179, %v181
    %v183 = vmul.f32 %v180, %v181
    %v184 = vld [vmem:[#allocation7 + $0x6] ss:$0 sm:$0xff]
    %v185 = vadd.f32 %v182, %v184
    %v186 = vadd.f32 %v183, %v184
    %v187 = vld [vmem:[#allocation5 + $0x10] sm:$0xf]
    %v188 = vld [vmem:[#allocation5 + $0x18] sm:$0xf]
    %v189 = vld [vmem:[#allocation5 + $0x20] sm:$0xf]
    %v190 = vld [vmem:[#allocation5 + $0x28] sm:$0xf]
    %v191 = vld [vmem:[#allocation5 + $0x30] sm:$0xf]
    %v192 = vld [vmem:[#allocation5 + $0x38] sm:$0xf]
    %v193 = vld [vmem:[#allocation5 + $0x40] sm:$0xf]
    %v194 = vld [vmem:[#allocation5 + $0x48] sm:$0xf]
    %v195 = vld [vmem:[#allocation5 + $0x50] sm:$0xf]
    %v196 = vld [vmem:[#allocation5 + $0x58] sm:$0xf]
    %v197 = vld [vmem:[#allocation5 + $0x60] sm:$0xf]
    %v198 = vld [vmem:[#allocation5 + $0x68] sm:$0xf]
    %v199 = vld [vmem:[#allocation5 + $0x70] sm:$0xf]
    %v200 = vld [vmem:[#allocation5 + $0x78] sm:$0xf]
    %v201 = vld [vmem:[#allocation5 + $0x80] sm:$0xf]
    %v202 = vld [vmem:[#allocation5 + $0x88] sm:$0xf]
    %v203 = vpack.c.bf16 %v186, %v185
    %v204 = vld [vmem:[#allocation7 + $0x7] ss:$0 sm:$0xff]
    %v221 = vunpack.c.l.b16 %v187
    %v222 = vunpack.c.l.b16 %v188
    %v223 = vunpack.c.l.b16 %v189
    %v224 = vunpack.c.l.b16 %v190
    %v225 = vunpack.c.l.b16 %v191
    %v226 = vunpack.c.l.b16 %v192
    %v227 = vunpack.c.l.b16 %v193
    %v228 = vunpack.c.l.b16 %v194
    %v229 = vunpack.c.l.b16 %v195
    %v230 = vunpack.c.l.b16 %v196
    %v231 = vunpack.c.l.b16 %v197
    %v232 = vunpack.c.l.b16 %v198
    %v233 = vunpack.c.l.b16 %v199
    %v234 = vunpack.c.l.b16 %v200
    %v235 = vunpack.c.l.b16 %v201
    %v236 = vunpack.c.l.b16 %v202
    %v237 = vpack.c.b16 %v222, %v221
    %v238 = vpack.c.b16 %v224, %v223
    %v239 = vpack.c.b16 %v226, %v225
    %v240 = vpack.c.b16 %v228, %v227
    %v241 = vpack.c.b16 %v230, %v229
    %v242 = vpack.c.b16 %v232, %v231
    %v243 = vpack.c.b16 %v234, %v233
    %v244 = vpack.c.b16 %v236, %v235
    %253 = vmatprep.subr.bf16.mxu0 0
    %254 = vmatpush1.bf16.msra.mxu0 %v237
    %255 = vmatprep.subr.bf16.mxu0 0
    %256 = vmatpush1.bf16.msra.mxu0 %v238
    %257 = vmatprep.subr.bf16.mxu0 0
    %258 = vmatpush1.bf16.msra.mxu0 %v239
    %259 = vmatprep.subr.bf16.mxu0 0
    %260 = vmatpush1.bf16.msra.mxu0 %v240
    %261 = vmatprep.subr.bf16.mxu0 0
    %262 = vmatpush1.bf16.msra.mxu0 %v241
    %263 = vmatprep.subr.bf16.mxu0 0
    %264 = vmatpush1.bf16.msra.mxu0 %v242
    %265 = vmatprep.subr.bf16.mxu0 0
    %266 = vmatpush1.bf16.msra.mxu0 %v243
    %267 = vmatprep.subr.bf16.mxu0 0
    %268 = vmatpush1.bf16.msra.mxu0 %v244
    %269 = vmatprep.subr.bf16.mxu0 0
    %270 = vmatpush1.bf16.msra.mxu0 0
    %271 = vmatprep.subr.bf16.mxu0 0
    %272 = vmatpush1.bf16.msra.mxu0 0
    %273 = vmatprep.subr.bf16.mxu0 0
    %274 = vmatpush1.bf16.msra.mxu0 0
    %275 = vmatprep.subr.bf16.mxu0 0
    %276 = vmatpush1.bf16.msra.mxu0 0
    %277 = vmatprep.subr.bf16.mxu0 0
    %278 = vmatpush1.bf16.msra.mxu0 0
    %279 = vmatprep.subr.bf16.mxu0 0
    %280 = vmatpush1.bf16.msra.mxu0 0
    %281 = vmatprep.subr.bf16.mxu0 0
    %282 = vmatpush1.bf16.msra.mxu0 0
    %283 = vmatprep.subr.bf16.mxu0 0
    %284 = vmatpush1.bf16.msra.mxu0 0
    %285 = vmatprep.mubr.bf16.mxu0 0
    %286 = vmatmul.mubr.bf16.gmra.mrb[0].mxu0 %v203
    %v287 = vpop.f32.mrb[0].mxu0
    %v288 = vadd.f32 %v204, %v287
    %v289 = vpop.f32.mrb[0].mxu0
    %v290 = vpop.f32.mrb[0].mxu0
    %v291 = vadd.f32 %v204, %v290
    %v292 = vpop.f32.mrb[0].mxu0
    %293 = vdwg.mxu0
    %v294 = vld [vmem:[#allocation5 + $0x90] sm:$0xf]
    %v295 = vld [vmem:[#allocation5 + $0x98] sm:$0xf]
    %v296 = vld [vmem:[#allocation5 + $0xa0] sm:$0xf]
    %v297 = vld [vmem:[#allocation5 + $0xa8] sm:$0xf]
    %v298 = vld [vmem:[#allocation5 + $0xb0] sm:$0xf]
    %v299 = vld [vmem:[#allocation5 + $0xb8] sm:$0xf]
    %v300 = vld [vmem:[#allocation5 + $0xc0] sm:$0xf]
    %v301 = vld [vmem:[#allocation5 + $0xc8] sm:$0xf]
    %v302 = vld [vmem:[#allocation5 + $0xd0] sm:$0xf]
    %v303 = vld [vmem:[#allocation5 + $0xd8] sm:$0xf]
    %v304 = vld [vmem:[#allocation5 + $0xe0] sm:$0xf]
    %v305 = vld [vmem:[#allocation5 + $0xe8] sm:$0xf]
    %v306 = vld [vmem:[#allocation5 + $0xf0] sm:$0xf]
    %v307 = vld [vmem:[#allocation5 + $0xf8] sm:$0xf]
    %v308 = vld [vmem:[#allocation5 + $0x100] sm:$0xf]
    %v309 = vld [vmem:[#allocation5 + $0x108] sm:$0xf]
    %v310 = vpack.c.bf16 %v291, %v288
    %v311 = vld [vmem:[#allocation7 + $0x10] ss:$0 sm:$0xff]
    %v328 = vunpack.c.l.b16 %v294
    %v329 = vunpack.c.l.b16 %v295
    %v330 = vunpack.c.l.b16 %v296
    %v331 = vunpack.c.l.b16 %v297
    %v332 = vunpack.c.l.b16 %v298
    %v333 = vunpack.c.l.b16 %v299
    %v334 = vunpack.c.l.b16 %v300
    %v335 = vunpack.c.l.b16 %v301
    %v336 = vunpack.c.l.b16 %v302
    %v337 = vunpack.c.l.b16 %v303
    %v338 = vunpack.c.l.b16 %v304
    %v339 = vunpack.c.l.b16 %v305
    %v340 = vunpack.c.l.b16 %v306
    %v341 = vunpack.c.l.b16 %v307
    %v342 = vunpack.c.l.b16 %v308
    %v343 = vunpack.c.l.b16 %v309
    %v344 = vpack.c.b16 %v329, %v328
    %v345 = vpack.c.b16 %v331, %v330
    %v346 = vpack.c.b16 %v333, %v332
    %v347 = vpack.c.b16 %v335, %v334
    %v348 = vpack.c.b16 %v337, %v336
    %v349 = vpack.c.b16 %v339, %v338
    %v350 = vpack.c.b16 %v341, %v340
    %v351 = vpack.c.b16 %v343, %v342
    %360 = vmatprep.subr.bf16.mxu0 0
    %361 = vmatpush1.bf16.msra.mxu0 %v344
    %362 = vmatprep.subr.bf16.mxu0 0
    %363 = vmatpush1.bf16.msra.mxu0 %v345
    %364 = vmatprep.subr.bf16.mxu0 0
    %365 = vmatpush1.bf16.msra.mxu0 %v346
    %366 = vmatprep.subr.bf16.mxu0 0
    %367 = vmatpush1.bf16.msra.mxu0 %v347
    %368 = vmatprep.subr.bf16.mxu0 0
    %369 = vmatpush1.bf16.msra.mxu0 %v348
    %370 = vmatprep.subr.bf16.mxu0 0
    %371 = vmatpush1.bf16.msra.mxu0 %v349
    %372 = vmatprep.subr.bf16.mxu0 0
    %373 = vmatpush1.bf16.msra.mxu0 %v350
    %374 = vmatprep.subr.bf16.mxu0 0
    %375 = vmatpush1.bf16.msra.mxu0 %v351
    %376 = vmatprep.subr.bf16.mxu0 0
    %377 = vmatpush1.bf16.msra.mxu0 0
    %378 = vmatprep.subr.bf16.mxu0 0
    %379 = vmatpush1.bf16.msra.mxu0 0
    %380 = vmatprep.subr.bf16.mxu0 0
    %381 = vmatpush1.bf16.msra.mxu0 0
    %382 = vmatprep.subr.bf16.mxu0 0
    %383 = vmatpush1.bf16.msra.mxu0 0
    %384 = vmatprep.subr.bf16.mxu0 0
    %385 = vmatpush1.bf16.msra.mxu0 0
    %386 = vmatprep.subr.bf16.mxu0 0
    %387 = vmatpush1.bf16.msra.mxu0 0
    %388 = vmatprep.subr.bf16.mxu0 0
    %389 = vmatpush1.bf16.msra.mxu0 0
    %390 = vmatprep.subr.bf16.mxu0 0
    %391 = vmatpush1.bf16.msra.mxu0 0
    %392 = vmatprep.mubr.bf16.mxu0 0
    %393 = vmatmul.mubr.bf16.gmra.mrb[0].mxu0 %v310
    %v394 = vpop.f32.mrb[0].mxu0
    %v395 = vadd.f32 %v311, %v394
    %v396 = vpop.f32.mrb[0].mxu0
    %v397 = vpop.f32.mrb[0].mxu0
    %v398 = vadd.f32 %v311, %v397
    %v399 = vpop.f32.mrb[0].mxu0
    %400 = vdwg.mxu0
    %v401 = vadd.f32 %v395, %v157
    %v402 = vadd.f32 %v398, %v158
    %403 = vadd.xlane.f32.xlu0 %v401
    %v404 = vpop.xlane.xlu0 %403
    %405 = vadd.xlane.f32.xlu0 %v402
    %v406 = vpop.xlane.xlu0 %405
    %v407 = vmul.f32 %v404, %v124
    %v408 = vmul.f32 %v406, %v124
    %v409 = vsub.f32 %v401, %v407
    %v410 = vsub.f32 %v402, %v408
    %v411 = vmul.f32 %v409, %v409
    %v412 = vmul.f32 %v410, %v410
    %413 = vadd.xlane.f32.xlu0 %v411
    %v414 = vpop.xlane.xlu0 %413
    %415 = vadd.xlane.f32.xlu0 %v412
    %v416 = vpop.xlane.xlu0 %415
    %v417 = vmul.f32 %v414, %v124
    %v418 = vmul.f32 %v416, %v124
    %v419 = vadd.f32 %v417, 1e-05
    %v420 = vadd.f32 %v418, 1e-05
    %v421 = vrsqrt.pop %v419
    %v422 = vrsqrt.pop %v420
    %v423 = vmul.f32 %v409, %v421
    %v424 = vmul.f32 %v410, %v422
    %v425 = vld [vmem:[#allocation7 + $0x11] ss:$0 sm:$0xff]
    %v426 = vmul.f32 %v423, %v425
    %v427 = vmul.f32 %v424, %v425
    %v428 = vld [vmem:[#allocation7 + $0x12] ss:$0 sm:$0xff]
    %v429 = vadd.f32 %v426, %v428
    %v430 = vadd.f32 %v427, %v428
    %v431 = vld [vmem:[#allocation5 + $0x110] sm:$0xff]
    %v432 = vld [vmem:[#allocation5 + $0x118] sm:$0xff]
    %v433 = vld [vmem:[#allocation5 + $0x120] sm:$0xff]
    %v434 = vld [vmem:[#allocation5 + $0x128] sm:$0xff]
    %v435 = vld [vmem:[#allocation5 + $0x130] sm:$0xff]
    %v436 = vld [vmem:[#allocation5 + $0x138] sm:$0xff]
    %v437 = vld [vmem:[#allocation5 + $0x140] sm:$0xff]
    %v438 = vld [vmem:[#allocation5 + $0x148] sm:$0xff]
    %v439 = vld [vmem:[#allocation5 + $0x150] sm:$0xff]
    %v440 = vld [vmem:[#allocation5 + $0x158] sm:$0xff]
    %v441 = vld [vmem:[#allocation5 + $0x160] sm:$0xff]
    %v442 = vld [vmem:[#allocation5 + $0x168] sm:$0xff]
    %v443 = vld [vmem:[#allocation5 + $0x170] sm:$0xff]
    %v444 = vld [vmem:[#allocation5 + $0x178] sm:$0xff]
    %v445 = vld [vmem:[#allocation5 + $0x180] sm:$0xff]
    %v446 = vld [vmem:[#allocation5 + $0x188] sm:$0xff]
    %v447 = vpack.c.bf16 %v430, %v429
    %s448 = scalar_lea.vmem [#allocation7], 19
    %v449 = vld [vmem:[%s448] ss:$8 sm:$0x3]
    %v451 = vlaneseq
    %v452 = vshrl.u32 %v451, 7
    %v453 = vsub.s32 0, %v452
    %v454 = vrot.slane %v449, %v453
    %v455 = vlaneseq
    %v456 = vshrl.u32 %v455, 7
    %v457 = vsub.s32 1, %v456
    %v458 = vrot.slane %v449, %v457
    %v477 = vunpack.c.l.b16 %v431
    %v478 = vunpack.c.h.b16 %v431
    %v479 = vunpack.c.l.b16 %v432
    %v480 = vunpack.c.h.b16 %v432
    %v481 = vunpack.c.l.b16 %v433
    %v482 = vunpack.c.h.b16 %v433
    %v483 = vunpack.c.l.b16 %v434
    %v484 = vunpack.c.h.b16 %v434
    %v485 = vunpack.c.l.b16 %v435
    %v486 = vunpack.c.h.b16 %v435
    %v487 = vunpack.c.l.b16 %v436
    %v488 = vunpack.c.h.b16 %v436
    %v489 = vunpack.c.l.b16 %v437
    %v490 = vunpack.c.h.b16 %v437
    %v491 = vunpack.c.l.b16 %v438
    %v492 = vunpack.c.h.b16 %v438
    %v493 = vunpack.c.l.b16 %v439
    %v494 = vunpack.c.h.b16 %v439
    %v495 = vunpack.c.l.b16 %v440
    %v496 = vunpack.c.h.b16 %v440
    %v497 = vunpack.c.l.b16 %v441
    %v498 = vunpack.c.h.b16 %v441
    %v499 = vunpack.c.l.b16 %v442
    %v500 = vunpack.c.h.b16 %v442
    %v501 = vunpack.c.l.b16 %v443
    %v502 = vunpack.c.h.b16 %v443
    %v503 = vunpack.c.l.b16 %v444
    %v504 = vunpack.c.h.b16 %v444
    %v505 = vunpack.c.l.b16 %v445
    %v506 = vunpack.c.h.b16 %v445
    %v507 = vunpack.c.l.b16 %v446
    %v508 = vunpack.c.h.b16 %v446
    %v509 = vpack.c.b16 %v479, %v477
    %v510 = vpack.c.b16 %v480, %v478
    %v511 = vpack.c.b16 %v483, %v481
    %v512 = vpack.c.b16 %v484, %v482
    %v513 = vpack.c.b16 %v487, %v485
    %v514 = vpack.c.b16 %v488, %v486
    %v515 = vpack.c.b16 %v491, %v489
    %v516 = vpack.c.b16 %v492, %v490
    %v517 = vpack.c.b16 %v495, %v493
    %v518 = vpack.c.b16 %v496, %v494
    %v519 = vpack.c.b16 %v499, %v497
    %v520 = vpack.c.b16 %v500, %v498
    %v521 = vpack.c.b16 %v503, %v501
    %v522 = vpack.c.b16 %v504, %v502
    %v523 = vpack.c.b16 %v507, %v505
    %v524 = vpack.c.b16 %v508, %v506
    %541 = vmatprep.subr.bf16.mxu0 %v510
    %542 = vmatpush1.bf16.msra.mxu0 %v509
    %543 = vmatprep.subr.bf16.mxu0 %v512
    %544 = vmatpush1.bf16.msra.mxu0 %v511
    %545 = vmatprep.subr.bf16.mxu0 %v514
    %546 = vmatpush1.bf16.msra.mxu0 %v513
    %547 = vmatprep.subr.bf16.mxu0 %v516
    %548 = vmatpush1.bf16.msra.mxu0 %v515
    %549 = vmatprep.subr.bf16.mxu0 %v518
    %550 = vmatpush1.bf16.msra.mxu0 %v517
    %551 = vmatprep.subr.bf16.mxu0 %v520
    %552 = vmatpush1.bf16.msra.mxu0 %v519
    %553 = vmatprep.subr.bf16.mxu0 %v522
    %554 = vmatpush1.bf16.msra.mxu0 %v521
    %555 = vmatprep.subr.bf16.mxu0 %v524
    %556 = vmatpush1.bf16.msra.mxu0 %v523
    %557 = vmatprep.subr.bf16.mxu0 0
    %558 = vmatpush1.bf16.msra.mxu0 0
    %559 = vmatprep.subr.bf16.mxu0 0
    %560 = vmatpush1.bf16.msra.mxu0 0
    %561 = vmatprep.subr.bf16.mxu0 0
    %562 = vmatpush1.bf16.msra.mxu0 0
    %563 = vmatprep.subr.bf16.mxu0 0
    %564 = vmatpush1.bf16.msra.mxu0 0
    %565 = vmatprep.subr.bf16.mxu0 0
    %566 = vmatpush1.bf16.msra.mxu0 0
    %567 = vmatprep.subr.bf16.mxu0 0
    %568 = vmatpush1.bf16.msra.mxu0 0
    %569 = vmatprep.subr.bf16.mxu0 0
    %570 = vmatpush1.bf16.msra.mxu0 0
    %571 = vmatprep.subr.bf16.mxu0 0
    %572 = vmatpush1.bf16.msra.mxu0 0
    %573 = vmatprep.mubr.bf16.mxu0 0
    %574 = vmatmul.mubr.bf16.gmra.mrb[0].mxu0 %v447
    %v575 = vpop.f32.mrb[0].mxu0
    %v576 = vadd.f32 %v454, %v575
    %v577 = vpop.f32.mrb[0].mxu0
    %v578 = vadd.f32 %v458, %v577
    %v579 = vpop.f32.mrb[0].mxu0
    %v580 = vadd.f32 %v454, %v579
    %v581 = vpop.f32.mrb[0].mxu0
    %v582 = vadd.f32 %v458, %v581
    %583 = vdwg.mxu0
    %v584 = vmul.f32 %v576, 0.5
    %v585 = vmul.f32 %v578, 0.5
    %v586 = vmul.f32 %v580, 0.5
    %v587 = vmul.f32 %v582, 0.5
    %v588 = vmul.f32 %v576, 0.70710677
    %v589 = vmul.f32 %v578, 0.70710677
    %v590 = vmul.f32 %v580, 0.70710677
    %v591 = vmul.f32 %v582, 0.70710677
    %v592 = verf.f32.pop %v588
    %v593 = verf.f32.pop %v589
    %v594 = verf.f32.pop %v590
    %v595 = verf.f32.pop %v591
    %v596 = vadd.f32 %v592, 1.0
    %v597 = vadd.f32 %v593, 1.0
    %v598 = vadd.f32 %v594, 1.0
    %v599 = vadd.f32 %v595, 1.0
    %v600 = vmul.f32 %v584, %v596
    %v601 = vmul.f32 %v585, %v597
    %v602 = vmul.f32 %v586, %v598
    %v603 = vmul.f32 %v587, %v599
    %v604 = vld [vmem:[#allocation5 + $0x190] sm:$0xf]
    %v605 = vld [vmem:[#allocation5 + $0x198] sm:$0xf]
    %v606 = vld [vmem:[#allocation5 + $0x1a0] sm:$0xf]
    %v607 = vld [vmem:[#allocation5 + $0x1a8] sm:$0xf]
    %v608 = vld [vmem:[#allocation5 + $0x1b0] sm:$0xf]
    %v609 = vld [vmem:[#allocation5 + $0x1b8] sm:$0xf]
    %v610 = vld [vmem:[#allocation5 + $0x1c0] sm:$0xf]
    %v611 = vld [vmem:[#allocation5 + $0x1c8] sm:$0xf]
    %v612 = vld [vmem:[#allocation5 + $0x1d0] sm:$0xf]
    %v613 = vld [vmem:[#allocation5 + $0x1d8] sm:$0xf]
    %v614 = vld [vmem:[#allocation5 + $0x1e0] sm:$0xf]
    %v615 = vld [vmem:[#allocation5 + $0x1e8] sm:$0xf]
    %v616 = vld [vmem:[#allocation5 + $0x1f0] sm:$0xf]
    %v617 = vld [vmem:[#allocation5 + $0x1f8] sm:$0xf]
    %v618 = vld [vmem:[#allocation5 + $0x200] sm:$0xf]
    %v619 = vld [vmem:[#allocation5 + $0x208] sm:$0xf]
    %v620 = vld [vmem:[#allocation5 + $0x210] sm:$0xf]
    %v621 = vld [vmem:[#allocation5 + $0x218] sm:$0xf]
    %v622 = vld [vmem:[#allocation5 + $0x220] sm:$0xf]
    %v623 = vld [vmem:[#allocation5 + $0x228] sm:$0xf]
    %v624 = vld [vmem:[#allocation5 + $0x230] sm:$0xf]
    %v625 = vld [vmem:[#allocation5 + $0x238] sm:$0xf]
    %v626 = vld [vmem:[#allocation5 + $0x240] sm:$0xf]
    %v627 = vld [vmem:[#allocation5 + $0x248] sm:$0xf]
    %v628 = vld [vmem:[#allocation5 + $0x250] sm:$0xf]
    %v629 = vld [vmem:[#allocation5 + $0x258] sm:$0xf]
    %v630 = vld [vmem:[#allocation5 + $0x260] sm:$0xf]
    %v631 = vld [vmem:[#allocation5 + $0x268] sm:$0xf]
    %v632 = vld [vmem:[#allocation5 + $0x270] sm:$0xf]
    %v633 = vld [vmem:[#allocation5 + $0x278] sm:$0xf]
    %v634 = vld [vmem:[#allocation5 + $0x280] sm:$0xf]
    %v635 = vld [vmem:[#allocation5 + $0x288] sm:$0xf]
    %v636 = vpack.c.bf16 %v602, %v600
    %v637 = vpack.c.bf16 %v603, %v601
    %v638 = vld [vmem:[#allocation7 + $0x14] ss:$0 sm:$0xff]
    %v671 = vunpack.c.l.b16 %v604
    %v672 = vunpack.c.l.b16 %v605
    %v673 = vunpack.c.l.b16 %v606
    %v674 = vunpack.c.l.b16 %v607
    %v675 = vunpack.c.l.b16 %v608
    %v676 = vunpack.c.l.b16 %v609
    %v677 = vunpack.c.l.b16 %v610
    %v678 = vunpack.c.l.b16 %v611
    %v679 = vunpack.c.l.b16 %v612
    %v680 = vunpack.c.l.b16 %v613
    %v681 = vunpack.c.l.b16 %v614
    %v682 = vunpack.c.l.b16 %v615
    %v683 = vunpack.c.l.b16 %v616
    %v684 = vunpack.c.l.b16 %v617
    %v685 = vunpack.c.l.b16 %v618
    %v686 = vunpack.c.l.b16 %v619
    %v687 = vunpack.c.l.b16 %v620
    %v688 = vunpack.c.l.b16 %v621
    %v689 = vunpack.c.l.b16 %v622
    %v690 = vunpack.c.l.b16 %v623
    %v691 = vunpack.c.l.b16 %v624
    %v692 = vunpack.c.l.b16 %v625
    %v693 = vunpack.c.l.b16 %v626
    %v694 = vunpack.c.l.b16 %v627
    %v695 = vunpack.c.l.b16 %v628
    %v696 = vunpack.c.l.b16 %v629
    %v697 = vunpack.c.l.b16 %v630
    %v698 = vunpack.c.l.b16 %v631
    %v699 = vunpack.c.l.b16 %v632
    %v700 = vunpack.c.l.b16 %v633
    %v701 = vunpack.c.l.b16 %v634
    %v702 = vunpack.c.l.b16 %v635
    %v703 = vpack.c.b16 %v672, %v671
    %v704 = vpack.c.b16 %v674, %v673
    %v705 = vpack.c.b16 %v676, %v675
    %v706 = vpack.c.b16 %v678, %v677
    %v707 = vpack.c.b16 %v680, %v679
    %v708 = vpack.c.b16 %v682, %v681
    %v709 = vpack.c.b16 %v684, %v683
    %v710 = vpack.c.b16 %v686, %v685
    %v711 = vpack.c.b16 %v688, %v687
    %v712 = vpack.c.b16 %v690, %v689
    %v713 = vpack.c.b16 %v692, %v691
    %v714 = vpack.c.b16 %v694, %v693
    %v715 = vpack.c.b16 %v696, %v695
    %v716 = vpack.c.b16 %v698, %v697
    %v717 = vpack.c.b16 %v700, %v699
    %v718 = vpack.c.b16 %v702, %v701
    %735 = vmatprep.subr.bf16.mxu0 0
    %736 = vmatpush1.bf16.msra.mxu0 %v703
    %737 = vmatprep.subr.bf16.mxu0 0
    %738 = vmatpush1.bf16.msra.mxu0 %v704
    %739 = vmatprep.subr.bf16.mxu0 0
    %740 = vmatpush1.bf16.msra.mxu0 %v705
    %741 = vmatprep.subr.bf16.mxu0 0
    %742 = vmatpush1.bf16.msra.mxu0 %v706
    %743 = vmatprep.subr.bf16.mxu0 0
    %744 = vmatpush1.bf16.msra.mxu0 %v707
    %745 = vmatprep.subr.bf16.mxu0 0
    %746 = vmatpush1.bf16.msra.mxu0 %v708
    %747 = vmatprep.subr.bf16.mxu0 0
    %748 = vmatpush1.bf16.msra.mxu0 %v709
    %749 = vmatprep.subr.bf16.mxu0 0
    %750 = vmatpush1.bf16.msra.mxu0 %v710
    %751 = vmatprep.subr.bf16.mxu0 0
    %752 = vmatpush1.bf16.msra.mxu0 %v711
    %753 = vmatprep.subr.bf16.mxu0 0
    %754 = vmatpush1.bf16.msra.mxu0 %v712
    %755 = vmatprep.subr.bf16.mxu0 0
    %756 = vmatpush1.bf16.msra.mxu0 %v713
    %757 = vmatprep.subr.bf16.mxu0 0
    %758 = vmatpush1.bf16.msra.mxu0 %v714
    %759 = vmatprep.subr.bf16.mxu0 0
    %760 = vmatpush1.bf16.msra.mxu0 %v715
    %761 = vmatprep.subr.bf16.mxu0 0
    %762 = vmatpush1.bf16.msra.mxu0 %v716
    %763 = vmatprep.subr.bf16.mxu0 0
    %764 = vmatpush1.bf16.msra.mxu0 %v717
    %765 = vmatprep.subr.bf16.mxu0 0
    %766 = vmatpush1.bf16.msra.mxu0 %v718
    %767 = vmatprep.mubr.bf16.mxu0 %v637
    %768 = vmatmul.mubr.bf16.gmra.mrb[0].mxu0 %v636
    %v769 = vpop.f32.mrb[0].mxu0
    %v770 = vadd.f32 %v638, %v769
    %v771 = vpop.f32.mrb[0].mxu0
    %v772 = vpop.f32.mrb[0].mxu0
    %v773 = vadd.f32 %v638, %v772
    %v774 = vpop.f32.mrb[0].mxu0
    %775 = vdwg.mxu0
    %v776 = vadd.f32 %v770, %v401
    %v777 = vadd.f32 %v773, %v402
    %778 = vadd.xlane.f32.xlu0 %v776
    %v779 = vpop.xlane.xlu0 %778
    %780 = vadd.xlane.f32.xlu0 %v777
    %v781 = vpop.xlane.xlu0 %780
    %v782 = vmul.f32 %v779, %v124
    %v783 = vmul.f32 %v781, %v124
    %v784 = vsub.f32 %v776, %v782
    %v785 = vsub.f32 %v777, %v783
    %v786 = vmul.f32 %v784, %v784
    %v787 = vmul.f32 %v785, %v785
    %788 = vadd.xlane.f32.xlu0 %v786
    %v789 = vpop.xlane.xlu0 %788
    %790 = vadd.xlane.f32.xlu0 %v787
    %v791 = vpop.xlane.xlu0 %790
    %v792 = vmul.f32 %v789, %v124
    %v793 = vmul.f32 %v791, %v124
    %v794 = vadd.f32 %v792, 1e-05
    %v795 = vadd.f32 %v793, 1e-05
    %v796 = vrsqrt.pop %v794
    %v797 = vrsqrt.pop %v795
    %v798 = vmul.f32 %v784, %v796
    %v799 = vmul.f32 %v785, %v797
    %v800 = vld [vmem:[#allocation7 + $0x15] ss:$0 sm:$0xff]
    %v801 = vmul.f32 %v798, %v800
    %v802 = vmul.f32 %v799, %v800
    %v803 = vld [vmem:[#allocation7 + $0x16] ss:$0 sm:$0xff]
    %v804 = vadd.f32 %v801, %v803
    %v805 = vadd.f32 %v802, %v803
    %v806 = vld [vmem:[#allocation5 + $0x290] sm:$0xf]
    %v807 = vld [vmem:[#allocation5 + $0x298] sm:$0xf]
    %v808 = vld [vmem:[#allocation5 + $0x2a0] sm:$0xf]
    %v809 = vld [vmem:[#allocation5 + $0x2a8] sm:$0xf]
    %v810 = vld [vmem:[#allocation5 + $0x2b0] sm:$0xf]
    %v811 = vld [vmem:[#allocation5 + $0x2b8] sm:$0xf]
    %v812 = vld [vmem:[#allocation5 + $0x2c0] sm:$0xf]
    %v813 = vld [vmem:[#allocation5 + $0x2c8] sm:$0xf]
    %v814 = vld [vmem:[#allocation5 + $0x2d0] sm:$0xf]
    %v815 = vld [vmem:[#allocation5 + $0x2d8] sm:$0xf]
    %v816 = vld [vmem:[#allocation5 + $0x2e0] sm:$0xf]
    %v817 = vld [vmem:[#allocation5 + $0x2e8] sm:$0xf]
    %v818 = vld [vmem:[#allocation5 + $0x2f0] sm:$0xf]
    %v819 = vld [vmem:[#allocation5 + $0x2f8] sm:$0xf]
    %v820 = vld [vmem:[#allocation5 + $0x300] sm:$0xf]
    %v821 = vld [vmem:[#allocation5 + $0x308] sm:$0xf]
    %v822 = vpack.c.bf16 %v805, %v804
    %v823 = vld [vmem:[#allocation7 + $0x17] ss:$0 sm:$0xff]
    %v840 = vunpack.c.l.b16 %v806
    %v841 = vunpack.c.l.b16 %v807
    %v842 = vunpack.c.l.b16 %v808
    %v843 = vunpack.c.l.b16 %v809
    %v844 = vunpack.c.l.b16 %v810
    %v845 = vunpack.c.l.b16 %v811
    %v846 = vunpack.c.l.b16 %v812
    %v847 = vunpack.c.l.b16 %v813
    %v848 = vunpack.c.l.b16 %v814
    %v849 = vunpack.c.l.b16 %v815
    %v850 = vunpack.c.l.b16 %v816
    %v851 = vunpack.c.l.b16 %v817
    %v852 = vunpack.c.l.b16 %v818
    %v853 = vunpack.c.l.b16 %v819
    %v854 = vunpack.c.l.b16 %v820
    %v855 = vunpack.c.l.b16 %v821
    %v856 = vpack.c.b16 %v841, %v840
    %v857 = vpack.c.b16 %v843, %v842
    %v858 = vpack.c.b16 %v845, %v844
    %v859 = vpack.c.b16 %v847, %v846
    %v860 = vpack.c.b16 %v849, %v848
    %v861 = vpack.c.b16 %v851, %v850
    %v862 = vpack.c.b16 %v853, %v852
    %v863 = vpack.c.b16 %v855, %v854
    %872 = vmatprep.subr.bf16.mxu0 0
    %873 = vmatpush1.bf16.msra.mxu0 %v856
    %874 = vmatprep.subr.bf16.mxu0 0
    %875 = vmatpush1.bf16.msra.mxu0 %v857
    %876 = vmatprep.subr.bf16.mxu0 0
    %877 = vmatpush1.bf16.msra.mxu0 %v858
    %878 = vmatprep.subr.bf16.mxu0 0
    %879 = vmatpush1.bf16.msra.mxu0 %v859
    %880 = vmatprep.subr.bf16.mxu0 0
    %881 = vmatpush1.bf16.msra.mxu0 %v860
    %882 = vmatprep.subr.bf16.mxu0 0
    %883 = vmatpush1.bf16.msra.mxu0 %v861
    %884 = vmatprep.subr.bf16.mxu0 0
    %885 = vmatpush1.bf16.msra.mxu0 %v862
    %886 = vmatprep.subr.bf16.mxu0 0
    %887 = vmatpush1.bf16.msra.mxu0 %v863
    %888 = vmatprep.subr.bf16.mxu0 0
    %889 = vmatpush1.bf16.msra.mxu0 0
    %890 = vmatprep.subr.bf16.mxu0 0
    %891 = vmatpush1.bf16.msra.mxu0 0
    %892 = vmatprep.subr.bf16.mxu0 0
    %893 = vmatpush1.bf16.msra.mxu0 0
    %894 = vmatprep.subr.bf16.mxu0 0
    %895 = vmatpush1.bf16.msra.mxu0 0
    %896 = vmatprep.subr.bf16.mxu0 0
    %897 = vmatpush1.bf16.msra.mxu0 0
    %898 = vmatprep.subr.bf16.mxu0 0
    %899 = vmatpush1.bf16.msra.mxu0 0
    %900 = vmatprep.subr.bf16.mxu0 0
    %901 = vmatpush1.bf16.msra.mxu0 0
    %902 = vmatprep.subr.bf16.mxu0 0
    %903 = vmatpush1.bf16.msra.mxu0 0
    %904 = vmatprep.mubr.bf16.mxu0 0
    %905 = vmatmul.mubr.bf16.gmra.mrb[0].mxu0 %v822
    %v906 = vpop.f32.mrb[0].mxu0
    %v907 = vadd.f32 %v823, %v906
    %v908 = vpop.f32.mrb[0].mxu0
    %v909 = vpop.f32.mrb[0].mxu0
    %v910 = vadd.f32 %v823, %v909
    %v911 = vpop.f32.mrb[0].mxu0
    %912 = vdwg.mxu0
    %v913 = vld [vmem:[#allocation5 + $0x310] sm:$0xf]
    %v914 = vld [vmem:[#allocation5 + $0x318] sm:$0xf]
    %v915 = vld [vmem:[#allocation5 + $0x320] sm:$0xf]
    %v916 = vld [vmem:[#allocation5 + $0x328] sm:$0xf]
    %v917 = vld [vmem:[#allocation5 + $0x330] sm:$0xf]
    %v918 = vld [vmem:[#allocation5 + $0x338] sm:$0xf]
    %v919 = vld [vmem:[#allocation5 + $0x340] sm:$0xf]
    %v920 = vld [vmem:[#allocation5 + $0x348] sm:$0xf]
    %v921 = vld [vmem:[#allocation5 + $0x350] sm:$0xf]
    %v922 = vld [vmem:[#allocation5 + $0x358] sm:$0xf]
    %v923 = vld [vmem:[#allocation5 + $0x360] sm:$0xf]
    %v924 = vld [vmem:[#allocation5 + $0x368] sm:$0xf]
    %v925 = vld [vmem:[#allocation5 + $0x370] sm:$0xf]
    %v926 = vld [vmem:[#allocation5 + $0x378] sm:$0xf]
    %v927 = vld [vmem:[#allocation5 + $0x380] sm:$0xf]
    %v928 = vld [vmem:[#allocation5 + $0x388] sm:$0xf]
    %v929 = vpack.c.bf16 %v910, %v907
    %v930 = vld [vmem:[#allocation7 + $0x20] ss:$0 sm:$0xff]
    %v947 = vunpack.c.l.b16 %v913
    %v948 = vunpack.c.l.b16 %v914
    %v949 = vunpack.c.l.b16 %v915
    %v950 = vunpack.c.l.b16 %v916
    %v951 = vunpack.c.l.b16 %v917
    %v952 = vunpack.c.l.b16 %v918
    %v953 = vunpack.c.l.b16 %v919
    %v954 = vunpack.c.l.b16 %v920
    %v955 = vunpack.c.l.b16 %v921
    %v956 = vunpack.c.l.b16 %v922
    %v957 = vunpack.c.l.b16 %v923
    %v958 = vunpack.c.l.b16 %v924
    %v959 = vunpack.c.l.b16 %v925
    %v960 = vunpack.c.l.b16 %v926
    %v961 = vunpack.c.l.b16 %v927
    %v962 = vunpack.c.l.b16 %v928
    %v963 = vpack.c.b16 %v948, %v947
    %v964 = vpack.c.b16 %v950, %v949
    %v965 = vpack.c.b16 %v952, %v951
    %v966 = vpack.c.b16 %v954, %v953
    %v967 = vpack.c.b16 %v956, %v955
    %v968 = vpack.c.b16 %v958, %v957
    %v969 = vpack.c.b16 %v960, %v959
    %v970 = vpack.c.b16 %v962, %v961
    %979 = vmatprep.subr.bf16.mxu0 0
    %980 = vmatpush1.bf16.msra.mxu0 %v963
    %981 = vmatprep.subr.bf16.mxu0 0
    %982 = vmatpush1.bf16.msra.mxu0 %v964
    %983 = vmatprep.subr.bf16.mxu0 0
    %984 = vmatpush1.bf16.msra.mxu0 %v965
    %985 = vmatprep.subr.bf16.mxu0 0
    %986 = vmatpush1.bf16.msra.mxu0 %v966
    %987 = vmatprep.subr.bf16.mxu0 0
    %988 = vmatpush1.bf16.msra.mxu0 %v967
    %989 = vmatprep.subr.bf16.mxu0 0
    %990 = vmatpush1.bf16.msra.mxu0 %v968
    %991 = vmatprep.subr.bf16.mxu0 0
    %992 = vmatpush1.bf16.msra.mxu0 %v969
    %993 = vmatprep.subr.bf16.mxu0 0
    %994 = vmatpush1.bf16.msra.mxu0 %v970
    %995 = vmatprep.subr.bf16.mxu0 0
    %996 = vmatpush1.bf16.msra.mxu0 0
    %997 = vmatprep.subr.bf16.mxu0 0
    %998 = vmatpush1.bf16.msra.mxu0 0
    %999 = vmatprep.subr.bf16.mxu0 0
    %1000 = vmatpush1.bf16.msra.mxu0 0
    %1001 = vmatprep.subr.bf16.mxu0 0
    %1002 = vmatpush1.bf16.msra.mxu0 0
    %1003 = vmatprep.subr.bf16.mxu0 0
    %1004 = vmatpush1.bf16.msra.mxu0 0
    %1005 = vmatprep.subr.bf16.mxu0 0
    %1006 = vmatpush1.bf16.msra.mxu0 0
    %1007 = vmatprep.subr.bf16.mxu0 0
    %1008 = vmatpush1.bf16.msra.mxu0 0
    %1009 = vmatprep.subr.bf16.mxu0 0
    %1010 = vmatpush1.bf16.msra.mxu0 0
    %1011 = vmatprep.mubr.bf16.mxu0 0
    %1012 = vmatmul.mubr.bf16.gmra.mrb[0].mxu0 %v929
    %v1013 = vpop.f32.mrb[0].mxu0
    %v1014 = vadd.f32 %v930, %v1013
    %v1015 = vpop.f32.mrb[0].mxu0
    %v1016 = vpop.f32.mrb[0].mxu0
    %v1017 = vadd.f32 %v930, %v1016
    %v1018 = vpop.f32.mrb[0].mxu0
    %1019 = vdwg.mxu0
    %v1020 = vadd.f32 %v1014, %v776
    %v1021 = vadd.f32 %v1017, %v777
    %1022 = vadd.xlane.f32.xlu0 %v1020
    %v1023 = vpop.xlane.xlu0 %1022
    %1024 = vadd.xlane.f32.xlu0 %v1021
    %v1025 = vpop.xlane.xlu0 %1024
    %v1026 = vmul.f32 %v1023, %v124
    %v1027 = vmul.f32 %v1025, %v124
    %v1028 = vsub.f32 %v1020, %v1026
    %v1029 = vsub.f32 %v1021, %v1027
    %v1030 = vmul.f32 %v1028, %v1028
    %v1031 = vmul.f32 %v1029, %v1029
    %1032 = vadd.xlane.f32.xlu0 %v1030
    %v1033 = vpop.xlane.xlu0 %1032
    %1034 = vadd.xlane.f32.xlu0 %v1031
    %v1035 = vpop.xlane.xlu0 %1034
    %v1036 = vmul.f32 %v1033, %v124
    %v1037 = vmul.f32 %v1035, %v124
    %v1038 = vadd.f32 %v1036, 1e-05
    %v1039 = vadd.f32 %v1037, 1e-05
    %v1040 = vrsqrt.pop %v1038
    %v1041 = vrsqrt.pop %v1039
    %v1042 = vmul.f32 %v1028, %v1040
    %v1043 = vmul.f32 %v1029, %v1041
    %v1044 = vld [vmem:[#allocation7 + $0x21] ss:$0 sm:$0xff]
    %v1045 = vmul.f32 %v1042, %v1044
    %v1046 = vmul.f32 %v1043, %v1044
    %v1047 = vld [vmem:[#allocation7 + $0x22] ss:$0 sm:$0xff]
    %v1048 = vadd.f32 %v1045, %v1047
    %v1049 = vadd.f32 %v1046, %v1047
    %v1050 = vld [vmem:[#allocation5 + $0x390] sm:$0xff]
    %v1051 = vld [vmem:[#allocation5 + $0x398] sm:$0xff]
    %v1052 = vld [vmem:[#allocation5 + $0x3a0] sm:$0xff]
    %v1053 = vld [vmem:[#allocation5 + $0x3a8] sm:$0xff]
    %v1054 = vld [vmem:[#allocation5 + $0x3b0] sm:$0xff]
    %v1055 = vld [vmem:[#allocation5 + $0x3b8] sm:$0xff]
    %v1056 = vld [vmem:[#allocation5 + $0x3c0] sm:$0xff]
    %v1057 = vld [vmem:[#allocation5 + $0x3c8] sm:$0xff]
    %v1058 = vld [vmem:[#allocation5 + $0x3d0] sm:$0xff]
    %v1059 = vld [vmem:[#allocation5 + $0x3d8] sm:$0xff]
    %v1060 = vld [vmem:[#allocation5 + $0x3e0] sm:$0xff]
    %v1061 = vld [vmem:[#allocation5 + $0x3e8] sm:$0xff]
    %v1062 = vld [vmem:[#allocation5 + $0x3f0] sm:$0xff]
    %v1063 = vld [vmem:[#allocation5 + $0x3f8] sm:$0xff]
    %v1064 = vld [vmem:[#allocation5 + $0x400] sm:$0xff]
    %v1065 = vld [vmem:[#allocation5 + $0x408] sm:$0xff]
    %v1066 = vpack.c.bf16 %v1049, %v1048
    %s1067 = scalar_lea.vmem [#allocation7], 35
    %v1068 = vld [vmem:[%s1067] ss:$8 sm:$0x3]
    %v1070 = vlaneseq
    %v1071 = vshrl.u32 %v1070, 7
    %v1072 = vsub.s32 0, %v1071
    %v1073 = vrot.slane %v1068, %v1072
    %v1074 = vlaneseq
    %v1075 = vshrl.u32 %v1074, 7
    %v1076 = vsub.s32 1, %v1075
    %v1077 = vrot.slane %v1068, %v1076
    %v1096 = vunpack.c.l.b16 %v1050
    %v1097 = vunpack.c.h.b16 %v1050
    %v1098 = vunpack.c.l.b16 %v1051
    %v1099 = vunpack.c.h.b16 %v1051
    %v1100 = vunpack.c.l.b16 %v1052
    %v1101 = vunpack.c.h.b16 %v1052
    %v1102 = vunpack.c.l.b16 %v1053
    %v1103 = vunpack.c.h.b16 %v1053
    %v1104 = vunpack.c.l.b16 %v1054
    %v1105 = vunpack.c.h.b16 %v1054
    %v1106 = vunpack.c.l.b16 %v1055
    %v1107 = vunpack.c.h.b16 %v1055
    %v1108 = vunpack.c.l.b16 %v1056
    %v1109 = vunpack.c.h.b16 %v1056
    %v1110 = vunpack.c.l.b16 %v1057
    %v1111 = vunpack.c.h.b16 %v1057
    %v1112 = vunpack.c.l.b16 %v1058
    %v1113 = vunpack.c.h.b16 %v1058
    %v1114 = vunpack.c.l.b16 %v1059
    %v1115 = vunpack.c.h.b16 %v1059
    %v1116 = vunpack.c.l.b16 %v1060
    %v1117 = vunpack.c.h.b16 %v1060
    %v1118 = vunpack.c.l.b16 %v1061
    %v1119 = vunpack.c.h.b16 %v1061
    %v1120 = vunpack.c.l.b16 %v1062
    %v1121 = vunpack.c.h.b16 %v1062
    %v1122 = vunpack.c.l.b16 %v1063
    %v1123 = vunpack.c.h.b16 %v1063
    %v1124 = vunpack.c.l.b16 %v1064
    %v1125 = vunpack.c.h.b16 %v1064
    %v1126 = vunpack.c.l.b16 %v1065
    %v1127 = vunpack.c.h.b16 %v1065
    %v1128 = vpack.c.b16 %v1098, %v1096
    %v1129 = vpack.c.b16 %v1099, %v1097
    %v1130 = vpack.c.b16 %v1102, %v1100
    %v1131 = vpack.c.b16 %v1103, %v1101
    %v1132 = vpack.c.b16 %v1106, %v1104
    %v1133 = vpack.c.b16 %v1107, %v1105
    %v1134 = vpack.c.b16 %v1110, %v1108
    %v1135 = vpack.c.b16 %v1111, %v1109
    %v1136 = vpack.c.b16 %v1114, %v1112
    %v1137 = vpack.c.b16 %v1115, %v1113
    %v1138 = vpack.c.b16 %v1118, %v1116
    %v1139 = vpack.c.b16 %v1119, %v1117
    %v1140 = vpack.c.b16 %v1122, %v1120
    %v1141 = vpack.c.b16 %v1123, %v1121
    %v1142 = vpack.c.b16 %v1126, %v1124
    %v1143 = vpack.c.b16 %v1127, %v1125
    %1160 = vmatprep.subr.bf16.mxu0 %v1129
    %1161 = vmatpush1.bf16.msra.mxu0 %v1128
    %1162 = vmatprep.subr.bf16.mxu0 %v1131
    %1163 = vmatpush1.bf16.msra.mxu0 %v1130
    %1164 = vmatprep.subr.bf16.mxu0 %v1133
    %1165 = vmatpush1.bf16.msra.mxu0 %v1132
    %1166 = vmatprep.subr.bf16.mxu0 %v1135
    %1167 = vmatpush1.bf16.msra.mxu0 %v1134
    %1168 = vmatprep.subr.bf16.mxu0 %v1137
    %1169 = vmatpush1.bf16.msra.mxu0 %v1136
    %1170 = vmatprep.subr.bf16.mxu0 %v1139
    %1171 = vmatpush1.bf16.msra.mxu0 %v1138
    %1172 = vmatprep.subr.bf16.mxu0 %v1141
    %1173 = vmatpush1.bf16.msra.mxu0 %v1140
    %1174 = vmatprep.subr.bf16.mxu0 %v1143
    %1175 = vmatpush1.bf16.msra.mxu0 %v1142
    %1176 = vmatprep.subr.bf16.mxu0 0
    %1177 = vmatpush1.bf16.msra.mxu0 0
    %1178 = vmatprep.subr.bf16.mxu0 0
    %1179 = vmatpush1.bf16.msra.mxu0 0
    %1180 = vmatprep.subr.bf16.mxu0 0
    %1181 = vmatpush1.bf16.msra.mxu0 0
    %1182 = vmatprep.subr.bf16.mxu0 0
    %1183 = vmatpush1.bf16.msra.mxu0 0
    %1184 = vmatprep.subr.bf16.mxu0 0
    %1185 = vmatpush1.bf16.msra.mxu0 0
    %1186 = vmatprep.subr.bf16.mxu0 0
    %1187 = vmatpush1.bf16.msra.mxu0 0
    %1188 = vmatprep.subr.bf16.mxu0 0
    %1189 = vmatpush1.bf16.msra.mxu0 0
    %1190 = vmatprep.subr.bf16.mxu0 0
    %1191 = vmatpush1.bf16.msra.mxu0 0
    %1192 = vmatprep.mubr.bf16.mxu0 0
    %1193 = vmatmul.mubr.bf16.gmra.mrb[0].mxu0 %v1066
    %v1194 = vpop.f32.mrb[0].mxu0
    %v1195 = vadd.f32 %v1073, %v1194
    %v1196 = vpop.f32.mrb[0].mxu0
    %v1197 = vadd.f32 %v1077, %v1196
    %v1198 = vpop.f32.mrb[0].mxu0
    %v1199 = vadd.f32 %v1073, %v1198
    %v1200 = vpop.f32.mrb[0].mxu0
    %v1201 = vadd.f32 %v1077, %v1200
    %1202 = vdwg.mxu0
    %v1203 = vmul.f32 %v1195, 0.5
    %v1204 = vmul.f32 %v1197, 0.5
    %v1205 = vmul.f32 %v1199, 0.5
    %v1206 = vmul.f32 %v1201, 0.5
    %v1207 = vmul.f32 %v1195, 0.70710677
    %v1208 = vmul.f32 %v1197, 0.70710677
    %v1209 = vmul.f32 %v1199, 0.70710677
    %v1210 = vmul.f32 %v1201, 0.70710677
    %v1211 = verf.f32.pop %v1207
    %v1212 = verf.f32.pop %v1208
    %v1213 = verf.f32.pop %v1209
    %v1214 = verf.f32.pop %v1210
    %v1215 = vadd.f32 %v1211, 1.0
    %v1216 = vadd.f32 %v1212, 1.0
    %v1217 = vadd.f32 %v1213, 1.0
    %v1218 = vadd.f32 %v1214, 1.0
    %v1219 = vmul.f32 %v1203, %v1215
    %v1220 = vmul.f32 %v1204, %v1216
    %v1221 = vmul.f32 %v1205, %v1217
    %v1222 = vmul.f32 %v1206, %v1218
    %v1223 = vld [vmem:[#allocation5 + $0x410] sm:$0xf]
    %v1224 = vld [vmem:[#allocation5 + $0x418] sm:$0xf]
    %v1225 = vld [vmem:[#allocation5 + $0x420] sm:$0xf]
    %v1226 = vld [vmem:[#allocation5 + $0x428] sm:$0xf]
    %v1227 = vld [vmem:[#allocation5 + $0x430] sm:$0xf]
    %v1228 = vld [vmem:[#allocation5 + $0x438] sm:$0xf]
    %v1229 = vld [vmem:[#allocation5 + $0x440] sm:$0xf]
    %v1230 = vld [vmem:[#allocation5 + $0x448] sm:$0xf]
    %v1231 = vld [vmem:[#allocation5 + $0x450] sm:$0xf]
    %v1232 = vld [vmem:[#allocation5 + $0x458] sm:$0xf]
    %v1233 = vld [vmem:[#allocation5 + $0x460] sm:$0xf]
    %v1234 = vld [vmem:[#allocation5 + $0x468] sm:$0xf]
    %v1235 = vld [vmem:[#allocation5 + $0x470] sm:$0xf]
    %v1236 = vld [vmem:[#allocation5 + $0x478] sm:$0xf]
    %v1237 = vld [vmem:[#allocation5 + $0x480] sm:$0xf]
    %v1238 = vld [vmem:[#allocation5 + $0x488] sm:$0xf]
    %v1239 = vld [vmem:[#allocation5 + $0x490] sm:$0xf]
    %v1240 = vld [vmem:[#allocation5 + $0x498] sm:$0xf]
    %v1241 = vld [vmem:[#allocation5 + $0x4a0] sm:$0xf]
    %v1242 = vld [vmem:[#allocation5 + $0x4a8] sm:$0xf]
    %v1243 = vld [vmem:[#allocation5 + $0x4b0] sm:$0xf]
    %v1244 = vld [vmem:[#allocation5 + $0x4b8] sm:$0xf]
    %v1245 = vld [vmem:[#allocation5 + $0x4c0] sm:$0xf]
    %v1246 = vld [vmem:[#allocation5 + $0x4c8] sm:$0xf]
    %v1247 = vld [vmem:[#allocation5 + $0x4d0] sm:$0xf]
    %v1248 = vld [vmem:[#allocation5 + $0x4d8] sm:$0xf]
    %v1249 = vld [vmem:[#allocation5 + $0x4e0] sm:$0xf]
    %v1250 = vld [vmem:[#allocation5 + $0x4e8] sm:$0xf]
    %v1251 = vld [vmem:[#allocation5 + $0x4f0] sm:$0xf]
    %v1252 = vld [vmem:[#allocation5 + $0x4f8] sm:$0xf]
    %v1253 = vld [vmem:[#allocation5 + $0x500] sm:$0xf]
    %v1254 = vld [vmem:[#allocation5 + $0x508] sm:$0xf]
    %v1255 = vpack.c.bf16 %v1221, %v1219
    %v1256 = vpack.c.bf16 %v1222, %v1220
    %v1257 = vld [vmem:[#allocation7 + $0x24] ss:$0 sm:$0xff]
    %v1290 = vunpack.c.l.b16 %v1223
    %v1291 = vunpack.c.l.b16 %v1224
    %v1292 = vunpack.c.l.b16 %v1225
    %v1293 = vunpack.c.l.b16 %v1226
    %v1294 = vunpack.c.l.b16 %v1227
    %v1295 = vunpack.c.l.b16 %v1228
    %v1296 = vunpack.c.l.b16 %v1229
    %v1297 = vunpack.c.l.b16 %v1230
    %v1298 = vunpack.c.l.b16 %v1231
    %v1299 = vunpack.c.l.b16 %v1232
    %v1300 = vunpack.c.l.b16 %v1233
    %v1301 = vunpack.c.l.b16 %v1234
    %v1302 = vunpack.c.l.b16 %v1235
    %v1303 = vunpack.c.l.b16 %v1236
    %v1304 = vunpack.c.l.b16 %v1237
    %v1305 = vunpack.c.l.b16 %v1238
    %v1306 = vunpack.c.l.b16 %v1239
    %v1307 = vunpack.c.l.b16 %v1240
    %v1308 = vunpack.c.l.b16 %v1241
    %v1309 = vunpack.c.l.b16 %v1242
    %v1310 = vunpack.c.l.b16 %v1243
    %v1311 = vunpack.c.l.b16 %v1244
    %v1312 = vunpack.c.l.b16 %v1245
    %v1313 = vunpack.c.l.b16 %v1246
    %v1314 = vunpack.c.l.b16 %v1247
    %v1315 = vunpack.c.l.b16 %v1248
    %v1316 = vunpack.c.l.b16 %v1249
    %v1317 = vunpack.c.l.b16 %v1250
    %v1318 = vunpack.c.l.b16 %v1251
    %v1319 = vunpack.c.l.b16 %v1252
    %v1320 = vunpack.c.l.b16 %v1253
    %v1321 = vunpack.c.l.b16 %v1254
    %v1322 = vpack.c.b16 %v1291, %v1290
    %v1323 = vpack.c.b16 %v1293, %v1292
    %v1324 = vpack.c.b16 %v1295, %v1294
    %v1325 = vpack.c.b16 %v1297, %v1296
    %v1326 = vpack.c.b16 %v1299, %v1298
    %v1327 = vpack.c.b16 %v1301, %v1300
    %v1328 = vpack.c.b16 %v1303, %v1302
    %v1329 = vpack.c.b16 %v1305, %v1304
    %v1330 = vpack.c.b16 %v1307, %v1306
    %v1331 = vpack.c.b16 %v1309, %v1308
    %v1332 = vpack.c.b16 %v1311, %v1310
    %v1333 = vpack.c.b16 %v1313, %v1312
    %v1334 = vpack.c.b16 %v1315, %v1314
    %v1335 = vpack.c.b16 %v1317, %v1316
    %v1336 = vpack.c.b16 %v1319, %v1318
    %v1337 = vpack.c.b16 %v1321, %v1320
    %1354 = vmatprep.subr.bf16.mxu0 0
    %1355 = vmatpush1.bf16.msra.mxu0 %v1322
    %1356 = vmatprep.subr.bf16.mxu0 0
    %1357 = vmatpush1.bf16.msra.mxu0 %v1323
    %1358 = vmatprep.subr.bf16.mxu0 0
    %1359 = vmatpush1.bf16.msra.mxu0 %v1324
    %1360 = vmatprep.subr.bf16.mxu0 0
    %1361 = vmatpush1.bf16.msra.mxu0 %v1325
    %1362 = vmatprep.subr.bf16.mxu0 0
    %1363 = vmatpush1.bf16.msra.mxu0 %v1326
    %1364 = vmatprep.subr.bf16.mxu0 0
    %1365 = vmatpush1.bf16.msra.mxu0 %v1327
    %1366 = vmatprep.subr.bf16.mxu0 0
    %1367 = vmatpush1.bf16.msra.mxu0 %v1328
    %1368 = vmatprep.subr.bf16.mxu0 0
    %1369 = vmatpush1.bf16.msra.mxu0 %v1329
    %1370 = vmatprep.subr.bf16.mxu0 0
    %1371 = vmatpush1.bf16.msra.mxu0 %v1330
    %1372 = vmatprep.subr.bf16.mxu0 0
    %1373 = vmatpush1.bf16.msra.mxu0 %v1331
    %1374 = vmatprep.subr.bf16.mxu0 0
    %1375 = vmatpush1.bf16.msra.mxu0 %v1332
    %1376 = vmatprep.subr.bf16.mxu0 0
    %1377 = vmatpush1.bf16.msra.mxu0 %v1333
    %1378 = vmatprep.subr.bf16.mxu0 0
    %1379 = vmatpush1.bf16.msra.mxu0 %v1334
    %1380 = vmatprep.subr.bf16.mxu0 0
    %1381 = vmatpush1.bf16.msra.mxu0 %v1335
    %1382 = vmatprep.subr.bf16.mxu0 0
    %1383 = vmatpush1.bf16.msra.mxu0 %v1336
    %1384 = vmatprep.subr.bf16.mxu0 0
    %1385 = vmatpush1.bf16.msra.mxu0 %v1337
    %1386 = vmatprep.mubr.bf16.mxu0 %v1256
    %1387 = vmatmul.mubr.bf16.gmra.mrb[0].mxu0 %v1255
    %v1388 = vpop.f32.mrb[0].mxu0
    %v1389 = vadd.f32 %v1257, %v1388
    %v1390 = vpop.f32.mrb[0].mxu0
    %v1391 = vpop.f32.mrb[0].mxu0
    %v1392 = vadd.f32 %v1257, %v1391
    %v1393 = vpop.f32.mrb[0].mxu0
    %1394 = vdwg.mxu0
    %v1395 = vadd.f32 %v1389, %v1020
    %v1396 = vadd.f32 %v1392, %v1021
    %v1397 = vld [vmem:[#allocation5 + $0x510] sm:$0xff]
    %v1398 = vld [vmem:[#allocation5 + $0x518] sm:$0xff]
    %v1399 = vld [vmem:[#allocation5 + $0x520] sm:$0xff]
    %v1400 = vld [vmem:[#allocation5 + $0x528] sm:$0xff]
    %v1401 = vld [vmem:[#allocation5 + $0x530] sm:$0xff]
    %v1402 = vld [vmem:[#allocation5 + $0x538] sm:$0xff]
    %v1403 = vld [vmem:[#allocation5 + $0x540] sm:$0xff]
    %v1404 = vld [vmem:[#allocation5 + $0x548] sm:$0xff]
    %v1405 = vld [vmem:[#allocation5 + $0x550] sm:$0xff]
    %v1406 = vld [vmem:[#allocation5 + $0x558] sm:$0xff]
    %v1407 = vld [vmem:[#allocation5 + $0x560] sm:$0xff]
    %v1408 = vld [vmem:[#allocation5 + $0x568] sm:$0xff]
    %v1409 = vld [vmem:[#allocation5 + $0x570] sm:$0xff]
    %v1410 = vld [vmem:[#allocation5 + $0x578] sm:$0xff]
    %v1411 = vld [vmem:[#allocation5 + $0x580] sm:$0xff]
    %v1412 = vld [vmem:[#allocation5 + $0x588] sm:$0xff]
    %v1413 = vpack.c.bf16 %v1396, %v1395
    %s1414 = scalar_lea.vmem [#allocation7], 37
    %v1415 = vld [vmem:[%s1414] ss:$8 sm:$0x3]
    %v1417 = vlaneseq
    %v1418 = vshrl.u32 %v1417, 7
    %v1419 = vsub.s32 0, %v1418
    %v1420 = vrot.slane %v1415, %v1419
    %v1421 = vlaneseq
    %v1422 = vshrl.u32 %v1421, 7
    %v1423 = vsub.s32 1, %v1422
    %v1424 = vrot.slane %v1415, %v1423
    %v1443 = vunpack.c.l.b16 %v1397
    %v1444 = vunpack.c.h.b16 %v1397
    %v1445 = vunpack.c.l.b16 %v1398
    %v1446 = vunpack.c.h.b16 %v1398
    %v1447 = vunpack.c.l.b16 %v1399
    %v1448 = vunpack.c.h.b16 %v1399
    %v1449 = vunpack.c.l.b16 %v1400
    %v1450 = vunpack.c.h.b16 %v1400
    %v1451 = vunpack.c.l.b16 %v1401
    %v1452 = vunpack.c.h.b16 %v1401
    %v1453 = vunpack.c.l.b16 %v1402
    %v1454 = vunpack.c.h.b16 %v1402
    %v1455 = vunpack.c.l.b16 %v1403
    %v1456 = vunpack.c.h.b16 %v1403
    %v1457 = vunpack.c.l.b16 %v1404
    %v1458 = vunpack.c.h.b16 %v1404
    %v1459 = vunpack.c.l.b16 %v1405
    %v1460 = vunpack.c.h.b16 %v1405
    %v1461 = vunpack.c.l.b16 %v1406
    %v1462 = vunpack.c.h.b16 %v1406
    %v1463 = vunpack.c.l.b16 %v1407
    %v1464 = vunpack.c.h.b16 %v1407
    %v1465 = vunpack.c.l.b16 %v1408
    %v1466 = vunpack.c.h.b16 %v1408
    %v1467 = vunpack.c.l.b16 %v1409
    %v1468 = vunpack.c.h.b16 %v1409
    %v1469 = vunpack.c.l.b16 %v1410
    %v1470 = vunpack.c.h.b16 %v1410
    %v1471 = vunpack.c.l.b16 %v1411
    %v1472 = vunpack.c.h.b16 %v1411
    %v1473 = vunpack.c.l.b16 %v1412
    %v1474 = vunpack.c.h.b16 %v1412
    %v1475 = vpack.c.b16 %v1445, %v1443
    %v1476 = vpack.c.b16 %v1446, %v1444
    %v1477 = vpack.c.b16 %v1449, %v1447
    %v1478 = vpack.c.b16 %v1450, %v1448
    %v1479 = vpack.c.b16 %v1453, %v1451
    %v1480 = vpack.c.b16 %v1454, %v1452
    %v1481 = vpack.c.b16 %v1457, %v1455
    %v1482 = vpack.c.b16 %v1458, %v1456
    %v1483 = vpack.c.b16 %v1461, %v1459
    %v1484 = vpack.c.b16 %v1462, %v1460
    %v1485 = vpack.c.b16 %v1465, %v1463
    %v1486 = vpack.c.b16 %v1466, %v1464
    %v1487 = vpack.c.b16 %v1469, %v1467
    %v1488 = vpack.c.b16 %v1470, %v1468
    %v1489 = vpack.c.b16 %v1473, %v1471
    %v1490 = vpack.c.b16 %v1474, %v1472
    %1507 = vmatprep.subr.bf16.mxu0 %v1476
    %1508 = vmatpush1.bf16.msra.mxu0 %v1475
    %1509 = vmatprep.subr.bf16.mxu0 %v1478
    %1510 = vmatpush1.bf16.msra.mxu0 %v1477
    %1511 = vmatprep.subr.bf16.mxu0 %v1480
    %1512 = vmatpush1.bf16.msra.mxu0 %v1479
    %1513 = vmatprep.subr.bf16.mxu0 %v1482
    %1514 = vmatpush1.bf16.msra.mxu0 %v1481
    %1515 = vmatprep.subr.bf16.mxu0 %v1484
    %1516 = vmatpush1.bf16.msra.mxu0 %v1483
    %1517 = vmatprep.subr.bf16.mxu0 %v1486
    %1518 = vmatpush1.bf16.msra.mxu0 %v1485
    %1519 = vmatprep.subr.bf16.mxu0 %v1488
    %1520 = vmatpush1.bf16.msra.mxu0 %v1487
    %1521 = vmatprep.subr.bf16.mxu0 %v1490
    %1522 = vmatpush1.bf16.msra.mxu0 %v1489
    %1523 = vmatprep.subr.bf16.mxu0 0
    %1524 = vmatpush1.bf16.msra.mxu0 0
    %1525 = vmatprep.subr.bf16.mxu0 0
    %1526 = vmatpush1.bf16.msra.mxu0 0
    %1527 = vmatprep.subr.bf16.mxu0 0
    %1528 = vmatpush1.bf16.msra.mxu0 0
    %1529 = vmatprep.subr.bf16.mxu0 0
    %1530 = vmatpush1.bf16.msra.mxu0 0
    %1531 = vmatprep.subr.bf16.mxu0 0
    %1532 = vmatpush1.bf16.msra.mxu0 0
    %1533 = vmatprep.subr.bf16.mxu0 0
    %1534 = vmatpush1.bf16.msra.mxu0 0
    %1535 = vmatprep.subr.bf16.mxu0 0
    %1536 = vmatpush1.bf16.msra.mxu0 0
    %1537 = vmatprep.subr.bf16.mxu0 0
    %1538 = vmatpush1.bf16.msra.mxu0 0
    %1539 = vmatprep.mubr.bf16.mxu0 0
    %1540 = vmatmul.mubr.bf16.gmra.mrb[0].mxu0 %v1413
    %v1541 = vpop.f32.mrb[0].mxu0
    %v1542 = vadd.f32 %v1420, %v1541
    %v1543 = vpop.f32.mrb[0].mxu0
    %v1544 = vadd.f32 %v1424, %v1543
    %v1545 = vpop.f32.mrb[0].mxu0
    %v1546 = vadd.f32 %v1420, %v1545
    %v1547 = vpop.f32.mrb[0].mxu0
    %v1548 = vadd.f32 %v1424, %v1547
    %1549 = vdwg.mxu0
    %v1550 = vadd.f32 %v1542, %v1544
    %1551 = vadd.xlane.f32.xlu0 %v1550
    %v1552 = vpop.xlane.xlu0 %1551
    %v1553 = vadd.f32 %v1546, %v1548
    %1554 = vadd.xlane.f32.xlu0 %v1553
    %v1555 = vpop.xlane.xlu0 %1554
    %v1556 = vrcp.pop 256.0
    %v1557 = vmul.f32 %v1552, %v1556
    %v1558 = vmul.f32 %v1555, %v1556
    %v1559 = vsub.f32 %v1542, %v1557
    %v1560 = vsub.f32 %v1544, %v1557
    %v1561 = vsub.f32 %v1546, %v1558
    %v1562 = vsub.f32 %v1548, %v1558
    %v1563 = vmul.f32 %v1559, %v1559
    %v1564 = vmul.f32 %v1560, %v1560
    %v1565 = vmul.f32 %v1561, %v1561
    %v1566 = vmul.f32 %v1562, %v1562
    %v1567 = vadd.f32 %v1563, %v1564
    %1568 = vadd.xlane.f32.xlu0 %v1567
    %v1569 = vpop.xlane.xlu0 %1568
    %v1570 = vadd.f32 %v1565, %v1566
    %1571 = vadd.xlane.f32.xlu0 %v1570
    %v1572 = vpop.xlane.xlu0 %1571
    %v1573 = vmul.f32 %v1569, %v1556
    %v1574 = vmul.f32 %v1572, %v1556
    %v1575 = vadd.f32 %v1573, 1e-05
    %v1576 = vadd.f32 %v1574, 1e-05
    %v1577 = vrsqrt.pop %v1575
    %v1578 = vrsqrt.pop %v1576
    %v1579 = vmul.f32 %v1559, %v1577
    %v1580 = vmul.f32 %v1560, %v1577
    %v1581 = vmul.f32 %v1561, %v1578
    %v1582 = vmul.f32 %v1562, %v1578
    %s1583 = scalar_lea.vmem [#allocation7], 38
    %v1584 = vld [vmem:[%s1583] ss:$8 sm:$0x3]
    %v1586 = vlaneseq
    %v1587 = vshrl.u32 %v1586, 7
    %v1588 = vsub.s32 0, %v1587
    %v1589 = vrot.slane %v1584, %v1588
    %v1590 = vlaneseq
    %v1591 = vshrl.u32 %v1590, 7
    %v1592 = vsub.s32 1, %v1591
    %v1593 = vrot.slane %v1584, %v1592
    %v1596 = vmul.f32 %v1579, %v1589
    %v1597 = vmul.f32 %v1580, %v1593
    %v1598 = vmul.f32 %v1581, %v1589
    %v1599 = vmul.f32 %v1582, %v1593
    %s1600 = scalar_lea.vmem [#allocation7], 39
    %v1601 = vld [vmem:[%s1600] ss:$8 sm:$0x3]
    %v1603 = vlaneseq
    %v1604 = vshrl.u32 %v1603, 7
    %v1605 = vsub.s32 0, %v1604
    %v1606 = vrot.slane %v1601, %v1605
    %v1607 = vlaneseq
    %v1608 = vshrl.u32 %v1607, 7
    %v1609 = vsub.s32 1, %v1608
    %v1610 = vrot.slane %v1601, %v1609
    %v1613 = vadd.f32 %v1596, %v1606
    %v1614 = vadd.f32 %v1597, %v1610
    %v1615 = vadd.f32 %v1598, %v1606
    %v1616 = vadd.f32 %v1599, %v1610
    %v1617 = vmul.f32 %v1613, 0.5
    %v1618 = vmul.f32 %v1614, 0.5
    %v1619 = vmul.f32 %v1615, 0.5
    %v1620 = vmul.f32 %v1616, 0.5
    %v1621 = vmul.f32 %v1613, 0.70710677
    %v1622 = vmul.f32 %v1614, 0.70710677
    %v1623 = vmul.f32 %v1615, 0.70710677
    %v1624 = vmul.f32 %v1616, 0.70710677
    %v1625 = verf.f32.pop %v1621
    %v1626 = verf.f32.pop %v1622
    %v1627 = verf.f32.pop %v1623
    %v1628 = verf.f32.pop %v1624
    %v1629 = vadd.f32 %v1625, 1.0
    %v1630 = vadd.f32 %v1626, 1.0
    %v1631 = vadd.f32 %v1627, 1.0
    %v1632 = vadd.f32 %v1628, 1.0
    %v1633 = vmul.f32 %v1617, %v1629
    %v1634 = vmul.f32 %v1618, %v1630
    %v1635 = vmul.f32 %v1619, %v1631
    %v1636 = vmul.f32 %v1620, %v1632
    %v1637 = vld [vmem:[#allocation5 + $0x590] sm:$0xf]
    %v1638 = vld [vmem:[#allocation5 + $0x598] sm:$0xf]
    %v1639 = vld [vmem:[#allocation5 + $0x5a0] sm:$0xf]
    %v1640 = vld [vmem:[#allocation5 + $0x5a8] sm:$0xf]
    %v1641 = vld [vmem:[#allocation5 + $0x5b0] sm:$0xf]
    %v1642 = vld [vmem:[#allocation5 + $0x5b8] sm:$0xf]
    %v1643 = vld [vmem:[#allocation5 + $0x5c0] sm:$0xf]
    %v1644 = vld [vmem:[#allocation5 + $0x5c8] sm:$0xf]
    %v1645 = vld [vmem:[#allocation5 + $0x5d0] sm:$0xf]
    %v1646 = vld [vmem:[#allocation5 + $0x5d8] sm:$0xf]
    %v1647 = vld [vmem:[#allocation5 + $0x5e0] sm:$0xf]
    %v1648 = vld [vmem:[#allocation5 + $0x5e8] sm:$0xf]
    %v1649 = vld [vmem:[#allocation5 + $0x5f0] sm:$0xf]
    %v1650 = vld [vmem:[#allocation5 + $0x5f8] sm:$0xf]
    %v1651 = vld [vmem:[#allocation5 + $0x600] sm:$0xf]
    %v1652 = vld [vmem:[#allocation5 + $0x608] sm:$0xf]
    %v1653 = vld [vmem:[#allocation5 + $0x610] sm:$0xf]
    %v1654 = vld [vmem:[#allocation5 + $0x618] sm:$0xf]
    %v1655 = vld [vmem:[#allocation5 + $0x620] sm:$0xf]
    %v1656 = vld [vmem:[#allocation5 + $0x628] sm:$0xf]
    %v1657 = vld [vmem:[#allocation5 + $0x630] sm:$0xf]
    %v1658 = vld [vmem:[#allocation5 + $0x638] sm:$0xf]
    %v1659 = vld [vmem:[#allocation5 + $0x640] sm:$0xf]
    %v1660 = vld [vmem:[#allocation5 + $0x648] sm:$0xf]
    %v1661 = vld [vmem:[#allocation5 + $0x650] sm:$0xf]
    %v1662 = vld [vmem:[#allocation5 + $0x658] sm:$0xf]
    %v1663 = vld [vmem:[#allocation5 + $0x660] sm:$0xf]
    %v1664 = vld [vmem:[#allocation5 + $0x668] sm:$0xf]
    %v1665 = vld [vmem:[#allocation5 + $0x670] sm:$0xf]
    %v1666 = vld [vmem:[#allocation5 + $0x678] sm:$0xf]
    %v1667 = vld [vmem:[#allocation5 + $0x680] sm:$0xf]
    %v1668 = vld [vmem:[#allocation5 + $0x688] sm:$0xf]
    %v1669 = vpack.c.bf16 %v1635, %v1633
    %v1670 = vpack.c.bf16 %v1636, %v1634
    %v1671 = vld [vmem:[#allocation7 + $0x30] ss:$0 sm:$0xff]
    %v1704 = vunpack.c.l.b16 %v1637
    %v1705 = vunpack.c.l.b16 %v1638
    %v1706 = vunpack.c.l.b16 %v1639
    %v1707 = vunpack.c.l.b16 %v1640
    %v1708 = vunpack.c.l.b16 %v1641
    %v1709 = vunpack.c.l.b16 %v1642
    %v1710 = vunpack.c.l.b16 %v1643
    %v1711 = vunpack.c.l.b16 %v1644
    %v1712 = vunpack.c.l.b16 %v1645
    %v1713 = vunpack.c.l.b16 %v1646
    %v1714 = vunpack.c.l.b16 %v1647
    %v1715 = vunpack.c.l.b16 %v1648
    %v1716 = vunpack.c.l.b16 %v1649
    %v1717 = vunpack.c.l.b16 %v1650
    %v1718 = vunpack.c.l.b16 %v1651
    %v1719 = vunpack.c.l.b16 %v1652
    %v1720 = vunpack.c.l.b16 %v1653
    %v1721 = vunpack.c.l.b16 %v1654
    %v1722 = vunpack.c.l.b16 %v1655
    %v1723 = vunpack.c.l.b16 %v1656
    %v1724 = vunpack.c.l.b16 %v1657
    %v1725 = vunpack.c.l.b16 %v1658
    %v1726 = vunpack.c.l.b16 %v1659
    %v1727 = vunpack.c.l.b16 %v1660
    %v1728 = vunpack.c.l.b16 %v1661
    %v1729 = vunpack.c.l.b16 %v1662
    %v1730 = vunpack.c.l.b16 %v1663
    %v1731 = vunpack.c.l.b16 %v1664
    %v1732 = vunpack.c.l.b16 %v1665
    %v1733 = vunpack.c.l.b16 %v1666
    %v1734 = vunpack.c.l.b16 %v1667
    %v1735 = vunpack.c.l.b16 %v1668
    %v1736 = vpack.c.b16 %v1705, %v1704
    %v1737 = vpack.c.b16 %v1707, %v1706
    %v1738 = vpack.c.b16 %v1709, %v1708
    %v1739 = vpack.c.b16 %v1711, %v1710
    %v1740 = vpack.c.b16 %v1713, %v1712
    %v1741 = vpack.c.b16 %v1715, %v1714
    %v1742 = vpack.c.b16 %v1717, %v1716
    %v1743 = vpack.c.b16 %v1719, %v1718
    %v1744 = vpack.c.b16 %v1721, %v1720
    %v1745 = vpack.c.b16 %v1723, %v1722
    %v1746 = vpack.c.b16 %v1725, %v1724
    %v1747 = vpack.c.b16 %v1727, %v1726
    %v1748 = vpack.c.b16 %v1729, %v1728
    %v1749 = vpack.c.b16 %v1731, %v1730
    %v1750 = vpack.c.b16 %v1733, %v1732
    %v1751 = vpack.c.b16 %v1735, %v1734
    %1768 = vmatprep.subr.bf16.mxu0 0
    %1769 = vmatpush1.bf16.msra.mxu0 %v1736
    %1770 = vmatprep.subr.bf16.mxu0 0
    %1771 = vmatpush1.bf16.msra.mxu0 %v1737
    %1772 = vmatprep.subr.bf16.mxu0 0
    %1773 = vmatpush1.bf16.msra.mxu0 %v1738
    %1774 = vmatprep.subr.bf16.mxu0 0
    %1775 = vmatpush1.bf16.msra.mxu0 %v1739
    %1776 = vmatprep.subr.bf16.mxu0 0
    %1777 = vmatpush1.bf16.msra.mxu0 %v1740
    %1778 = vmatprep.subr.bf16.mxu0 0
    %1779 = vmatpush1.bf16.msra.mxu0 %v1741
    %1780 = vmatprep.subr.bf16.mxu0 0
    %1781 = vmatpush1.bf16.msra.mxu0 %v1742
    %1782 = vmatprep.subr.bf16.mxu0 0
    %1783 = vmatpush1.bf16.msra.mxu0 %v1743
    %1784 = vmatprep.subr.bf16.mxu0 0
    %1785 = vmatpush1.bf16.msra.mxu0 %v1744
    %1786 = vmatprep.subr.bf16.mxu0 0
    %1787 = vmatpush1.bf16.msra.mxu0 %v1745
    %1788 = vmatprep.subr.bf16.mxu0 0
    %1789 = vmatpush1.bf16.msra.mxu0 %v1746
    %1790 = vmatprep.subr.bf16.mxu0 0
    %1791 = vmatpush1.bf16.msra.mxu0 %v1747
    %1792 = vmatprep.subr.bf16.mxu0 0
    %1793 = vmatpush1.bf16.msra.mxu0 %v1748
    %1794 = vmatprep.subr.bf16.mxu0 0
    %1795 = vmatpush1.bf16.msra.mxu0 %v1749
    %1796 = vmatprep.subr.bf16.mxu0 0
    %1797 = vmatpush1.bf16.msra.mxu0 %v1750
    %1798 = vmatprep.subr.bf16.mxu0 0
    %1799 = vmatpush1.bf16.msra.mxu0 %v1751
    %1800 = vmatprep.mubr.bf16.mxu0 %v1670
    %1801 = vmatmul.mubr.bf16.gmra.mrb[0].mxu0 %v1669
    %v1802 = vpop.f32.mrb[0].mxu0
    %v1803 = vadd.f32 %v1671, %v1802
    %v1804 = vpop.f32.mrb[0].mxu0
    %v1805 = vpop.f32.mrb[0].mxu0
    %v1806 = vadd.f32 %v1671, %v1805
    %v1807 = vpop.f32.mrb[0].mxu0
    %1808 = vdwg.mxu0
    %1809 = vadd.xlane.f32.xlu0 %v1803
    %v1810 = vpop.xlane.xlu0 %1809
    %1811 = vadd.xlane.f32.xlu0 %v1806
    %v1812 = vpop.xlane.xlu0 %1811
    %v1813 = vmul.f32 %v1810, %v124
    %v1814 = vmul.f32 %v1812, %v124
    %v1815 = vsub.f32 %v1803, %v1813
    %v1816 = vsub.f32 %v1806, %v1814
    %v1817 = vmul.f32 %v1815, %v1815
    %v1818 = vmul.f32 %v1816, %v1816
    %1819 = vadd.xlane.f32.xlu0 %v1817
    %v1820 = vpop.xlane.xlu0 %1819
    %1821 = vadd.xlane.f32.xlu0 %v1818
    %v1822 = vpop.xlane.xlu0 %1821
    %v1823 = vmul.f32 %v1820, %v124
    %v1824 = vmul.f32 %v1822, %v124
    %v1825 = vadd.f32 %v1823, 1e-05
    %v1826 = vadd.f32 %v1824, 1e-05
    %v1827 = vrsqrt.pop %v1825
    %v1828 = vrsqrt.pop %v1826
    %v1829 = vmul.f32 %v1815, %v1827
    %v1830 = vmul.f32 %v1816, %v1828
    %v1831 = vld [vmem:[#allocation7 + $0x31] ss:$0 sm:$0xff]
    %v1832 = vmul.f32 %v1829, %v1831
    %v1833 = vmul.f32 %v1830, %v1831
    %v1834 = vld [vmem:[#allocation7 + $0x32] ss:$0 sm:$0xff]
    %v1835 = vadd.f32 %v1832, %v1834
    %v1836 = vadd.f32 %v1833, %v1834
    %v1837 = vmul.f32 %v1835, 0.5
    %v1838 = vmul.f32 %v1836, 0.5
    %v1839 = vmul.f32 %v1835, 0.70710677
    %v1840 = vmul.f32 %v1836, 0.70710677
    %v1841 = verf.f32.pop %v1839
    %v1842 = verf.f32.pop %v1840
    %v1843 = vadd.f32 %v1841, 1.0
    %v1844 = vadd.f32 %v1842, 1.0
    %v1845 = vmul.f32 %v1837, %v1843
    %v1846 = vmul.f32 %v1838, %v1844
    %v1847 = vld [vmem:[#allocation7 + $0x33] ss:$0 sm:$0xff]
    %v1848 = vmul.f32 %v1845, %v1847
    %v1849 = vmul.f32 %v1846, %v1847
    %1850 = vadd.xlane.f32.xlu0 %v1848
    %v1851 = vpop.xlane.xlu0 %1850
    %1852 = vadd.xlane.f32.xlu0 %v1849
    %v1853 = vpop.xlane.xlu0 %1852
    %v1854 = vld [vmem:[#allocation7 + $0x34] ss:$0 sm:$0xff]
    %v1855 = vadd.f32 %v1851, %v1854
    %v1856 = vadd.f32 %v1853, %v1854
    %1858 = vset.pattern.permute.xlu0 0
    %1859 = vperm.xlu0 %1858, %v1855
    %v1860 = vpop.permute.xlu0 %1859
    %1863 = vset.pattern.permute.xlu0 0
    %1864 = vperm.xlu0 %1863, %v1856
    %v1865 = vpop.permute.xlu0 %1864
    %1867 = vst [vmem:[#allocation8] sm:$0xff] %v1860
    %1868 = vst [vmem:[#allocation8 + $0x8] sm:$0xff] %v1865
    // Predicated region
    $region26: #{tpu_custom_call.1} parent=1 // pred_check
      _
    $region27: #{tpu_custom_call.1} parent=1 // pred_check_branch
      %1870 = sbr.rel (0) target = $region29
    $region28: #{tpu_custom_call.1} parent=1 // pred_region
      %s1872 = ssub.s32 256, 256
      %1873 = vsyncadd [#allocation4], %s1872
      %s1874 = sshll.u32 [#allocation8], 4
      %s1875 = int_to_ptr.vmem [resolvable:$true] %s1874
      %1880 = dma.vmem_to_hbm [thread:$0]  %s1875, 256, %s3, [#allocation4], 128, 128, 8
    $region29: #{tpu_custom_call.1} parent=1 // pred_fallthru
      _
    // Predicated region
    $region30: #{tpu_custom_call.1} parent=1 // pred_check
      _
    $region31: #{tpu_custom_call.1} parent=1 // pred_check_branch
      %1882 = sbr.rel (0) target = $region33
    $region32: #{tpu_custom_call.1} parent=1 // pred_region
      %1883 = dma.done [#allocation4], 256
    $region33: #{tpu_custom_call.1} parent=1 // pred_fallthru
      _
    %1884 = vsyncpa [#allocation3], 1
    %1885 = vsyncpa [#allocation6], 1
    %1886 = vsyncpa [#allocation4], 1

</llo_original>
